<compile_context>
chip_gen: v6e
topology: v6e:2x2x1
jax: 0.10.0
libtpu: 0.0.40
codegen_flags: <defaults>
</compile_context>

<pallas_src>
import math
import functools

import jax
import jax.numpy as jnp
from jax.experimental import pallas as pl
from jax.experimental.pallas import tpu as pltpu


# ---------------------------------------------------------------------------
# Kernel
# ---------------------------------------------------------------------------
def _pointer_prob_kernel(q_ref, k_ref, wq_ref, bq_ref, wk_ref, bk_ref,
                         *rest, scale):
    """One (batch-block, q-tile) grid step.

    q_ref  : (Bb, Tq, D)  original input dtype (e.g. f32)
    k_ref  : (Bb, Lk, D)  original input dtype
    wq_ref : (D, D)       bf16, already transposed to (in, out)
    bq_ref : (1, D)       f32
    wk_ref : (D, D)       bf16
    bk_ref : (1, D)       f32
    rest   : (mask_ref, out_ref) or (out_ref,)
    """
    if len(rest) == 2:
        mask_ref, out_ref = rest
    else:
        mask_ref = None
        (out_ref,) = rest

    Bb, Tq, D = q_ref.shape
    _, Lk, _ = k_ref.shape

    # bf16 MXU operands are produced in-kernel (no wrapper HBM cast pass).
    # Flatten the batch block into the matmul M dim so the projection matmuls
    # fill the MXU even when Tq / Lk are small.
    q2 = q_ref[...].reshape(Bb * Tq, D).astype(jnp.bfloat16)
    k2 = k_ref[...].reshape(Bb * Lk, D).astype(jnp.bfloat16)

    q_proj = jnp.dot(q2, wq_ref[...],
                     preferred_element_type=jnp.float32) + bq_ref[...]
    k_proj = jnp.dot(k2, wk_ref[...],
                     preferred_element_type=jnp.float32) + bk_ref[...]

    q_proj = q_proj.astype(jnp.bfloat16).reshape(Bb, Tq, D)
    k_proj = k_proj.astype(jnp.bfloat16).reshape(Bb, Lk, D)

    # Batched NT score matmul on the MXU, f32 accumulation.
    scores = jnp.einsum("bqd,bkd->bqk", q_proj, k_proj,
                        preferred_element_type=jnp.float32)

    # Folded clip_value / sqrt(d_k); epilogue stays in f32.
    scores = scale * jnp.tanh(scores)

    if mask_ref is not None:
        # Compare in the mask's original dtype: no conversion pass needed.
        scores = jnp.where(mask_ref[...] != 0, scores, jnp.float32(-1e9))

    out_ref[...] = scores.astype(out_ref.dtype)


# ---------------------------------------------------------------------------
# Tiling / VMEM heuristics
# ---------------------------------------------------------------------------
def _vmem_budget_bytes():
    """Generation-aware per-kernel VMEM budget."""
    try:
        cap = int(pltpu.get_tpu_info().vmem_capacity_bytes)
    except Exception:
        cap = 64 * 1024 * 1024          # conservative (v7x-like) fallback
    if cap >= 100 * 1024 * 1024:        # v5e / v6e: 128 MiB physical
        return 80 * 1024 * 1024
    return 48 * 1024 * 1024             # v7x: 64 MiB physical per TensorCore


def _pick_tiling(B, Lq, Lk, D, q_bytes, k_bytes, mask_bytes, out_bytes, budget):
    """Choose (Bb, Tq, n_q): batch block, Lq tile size, number of Lq tiles."""

    def est(bb, tq, wbuf=2):
        # Double-buffered pipeline blocks.
        blocks = 2 * (bb * tq * D * q_bytes
                      + bb * Lk * D * k_bytes
                      + bb * tq * Lk * mask_bytes
                      + bb * tq * Lk * out_bytes)
        # Weight / bias blocks (bf16 weights, f32 biases).
        weights = wbuf * (2 * D * D * 2 + 2 * D * 4)
        # In-kernel temporaries: bf16 copies of q/k, f32 + bf16 projections,
        # f32 scores (x2 for the tanh / where temporaries).
        temps = (bb * tq * D * (2 + 4 + 2)
                 + bb * Lk * D * (2 + 4 + 2)
                 + 2 * bb * tq * Lk * 4)
        return blocks + weights + temps

    # --- Lq tile: full Lq if it fits VMEM, else the biggest tile that does.
    if est(1, Lq) <= budget:
        tq = Lq
    else:
        tq = None
        cands = [c for c in (1024, 512, 256, 128, 64, 32) if c < Lq]
        for c in cands:                               # prefer exact divisors
            if Lq % c == 0 and est(1, c) <= budget:
                tq = c
                break
        if tq is None:
            for c in cands:                           # ragged last tile is OK
                if est(1, c) <= budget:
                    tq = c
                    break
        if tq is None:
            tq = Lq if Lq <= 32 else 32
    n_q = pl.cdiv(Lq, tq)

    # --- Batch block: a divisor of B (no B padding, no ragged batch tail).
    divisors = [d for d in range(1, B + 1) if B % d == 0]
    if n_q == 1 and B > 1:
        # Keep >= 2 grid steps so both v7x TensorCores get work.
        capped = [d for d in divisors if d <= B // 2]
        if capped:
            divisors = capped
    fits = [d for d in divisors if est(d, tq) <= budget] or [1]
    target = pl.cdiv(512, tq)            # aim for >= 512 projection rows/step
    good = sorted(d for d in fits if d >= target)
    bb = good[0] if good else max(fits)
    return bb, tq, n_q


# ---------------------------------------------------------------------------
# Wrapper
# ---------------------------------------------------------------------------
def pointer_prob_generator(query, key, wq, bq, wk, bk, mask=None,
                           clip_value=10.0, out_dtype=jnp.float32):
    """query: (B, Lq, D); key: (B, Lk, D); wq/wk: (D, D) in PyTorch (out, in)
    layout; bq/bk: (D,); mask: (B, Lq, Lk) with 0 = masked, or None.
    Returns (B, Lq, Lk) attention scores in `out_dtype`."""
    B, Lq, D = query.shape
    Bk, Lk, Dk = key.shape
    assert Bk == B and Dk == D, "query/key batch or feature mismatch"

    # d_k in the PyTorch module is the *projected* feature dim == d_model == D.
    scale = float(clip_value) / math.sqrt(float(D))

    # Only the tiny parameters are reshaped / cast outside the kernel.
    wq_t = jnp.transpose(wq).astype(jnp.bfloat16)        # (in, out)
    wk_t = jnp.transpose(wk).astype(jnp.bfloat16)
    bq2 = bq.astype(jnp.float32).reshape(1, D)
    bk2 = bk.astype(jnp.float32).reshape(1, D)

    if mask is not None and jnp.issubdtype(mask.dtype, jnp.bool_):
        mask = mask.astype(jnp.int8)                     # same width, TPU-friendly

    q_bytes = query.dtype.itemsize
    k_bytes = key.dtype.itemsize
    mask_bytes = 0 if mask is None else mask.dtype.itemsize
    out_bytes = jnp.dtype(out_dtype).itemsize

    budget = _vmem_budget_bytes()
    Bb, Tq, n_q = _pick_tiling(B, Lq, Lk, D, q_bytes, k_bytes,
                               mask_bytes, out_bytes, budget)
    grid = (B // Bb, n_q)

    kernel = functools.partial(_pointer_prob_kernel, scale=scale)

    def run(single_buffer_weights):
        const_kw = ({"pipeline_mode": pl.Buffered(1)}
                    if single_buffer_weights else {})
        in_specs = [
            pl.BlockSpec((Bb, Tq, D), lambda b, q: (b, q, 0)),        # query
            pl.BlockSpec((Bb, Lk, D), lambda b, q: (b, 0, 0)),        # key
            pl.BlockSpec((D, D), lambda b, q: (0, 0), **const_kw),    # Wq^T
            pl.BlockSpec((1, D), lambda b, q: (0, 0), **const_kw),    # bq
            pl.BlockSpec((D, D), lambda b, q: (0, 0), **const_kw),    # Wk^T
            pl.BlockSpec((1, D), lambda b, q: (0, 0), **const_kw),    # bk
        ]
        args = [query, key, wq_t, bq2, wk_t, bk2]
        if mask is not None:
            in_specs.append(pl.BlockSpec((Bb, Tq, Lk), lambda b, q: (b, q, 0)))
            args.append(mask)

        call = pl.pallas_call(
            kernel,
            out_shape=jax.ShapeDtypeStruct((B, Lq, Lk), out_dtype),
            grid_spec=pltpu.PrefetchScalarGridSpec(
                num_scalar_prefetch=0,
                grid=grid,
                in_specs=in_specs,
                out_specs=pl.BlockSpec((Bb, Tq, Lk), lambda b, q: (b, q, 0)),
            ),
            compiler_params=pltpu.CompilerParams(
                dimension_semantics=("parallel", "parallel"),
                vmem_limit_bytes=int(budget)),
        )
        return call(*args)

    try:
        # Constant-index weight/bias blocks single-buffered (big VMEM saving
        # for large D, e.g. half of v7x's VMEM at D ~ 2048).
        return run(True)
    except Exception:
        # Fallback if this jax build rejects pipeline_mode=pl.Buffered(1).
        return run(False)


# ---------------------------------------------------------------------------
# References (for the built-in correctness check)
# ---------------------------------------------------------------------------
def _reference_f32(query, key, wq, bq, wk, bk, mask=None, clip_value=10.0):
    # Pure f32 mirror of the PyTorch module.
    q = jnp.einsum("bld,od->blo", query, wq) + bq
    k = jnp.einsum("bld,od->blo", key, wk) + bk
    d_k = k.shape[-1]
    s = jnp.einsum("bqd,bkd->bqk", q, k)
    s = clip_value * jnp.tanh(s) / math.sqrt(d_k)
    if mask is not None:
        s = jnp.where(mask == 0, jnp.float32(-1e9), s)
    return s


def _reference_bf16(query, key, wq, bq, wk, bk, mask=None, clip_value=10.0):
    # Mirrors the kernel numerics: bf16 matmul operands, f32 accumulation.
    q = jnp.einsum("bld,od->blo", query.astype(jnp.bfloat16),
                   wq.astype(jnp.bfloat16),
                   preferred_element_type=jnp.float32) + bq
    k = jnp.einsum("bld,od->blo", key.astype(jnp.bfloat16),
                   wk.astype(jnp.bfloat16),
                   preferred_element_type=jnp.float32) + bk
    d_k = k.shape[-1]
    s = jnp.einsum("bqd,bkd->bqk", q.astype(jnp.bfloat16),
                   k.astype(jnp.bfloat16),
                   preferred_element_type=jnp.float32)
    s = (clip_value / math.sqrt(d_k)) * jnp.tanh(s)
    if mask is not None:
        s = jnp.where(mask == 0, jnp.float32(-1e9), s)
    return s


if __name__ == "__main__":
    B, Lq, Lk, D = 2, 8, 8, 32
    root = jax.random.PRNGKey(0)
    kq, kk, kwq, kbq, kwk, kbk, km = jax.random.split(root, 7)

    query = jax.random.normal(kq, (B, Lq, D), dtype=jnp.float32)
    key = jax.random.normal(kk, (B, Lk, D), dtype=jnp.float32)

    # Deterministic Linear(d_model, d_model) params (PyTorch (out, in) layout).
    bound = 1.0 / math.sqrt(D)
    wq = jax.random.uniform(kwq, (D, D), minval=-bound, maxval=bound,
                            dtype=jnp.float32)
    bq = jax.random.uniform(kbq, (D,), minval=-bound, maxval=bound,
                            dtype=jnp.float32)
    wk = jax.random.uniform(kwk, (D, D), minval=-bound, maxval=bound,
                            dtype=jnp.float32)
    bk = jax.random.uniform(kbk, (D,), minval=-bound, maxval=bound,
                            dtype=jnp.float32)

    mask = (jax.random.uniform(km, (B, Lq, Lk)) > 0.2).astype(jnp.int32)

    # --- masked, f32 output (matches the PyTorch forward) ---
    out = pointer_prob_generator(query, key, wq, bq, wk, bk, mask,
                                 clip_value=10.0)
    out = jax.block_until_ready(out)
    assert out.shape == (B, Lq, Lk) and out.dtype == jnp.float32

    ref_bf16 = _reference_bf16(query, key, wq, bq, wk, bk, mask, 10.0)
    assert jnp.allclose(out, ref_bf16, atol=2e-3, rtol=2e-3), \
        "mismatch vs bf16-operand reference"

    ref_f32 = _reference_f32(query, key, wq, bq, wk, bk, mask, 10.0)
    max_diff = float(jnp.max(jnp.abs(out - ref_f32)))
    assert max_diff < 0.5, f"bf16 drift vs f32 reference too large: {max_diff}"

    # --- mask=None path (module default) ---
    out_nm = jax.block_until_ready(
        pointer_prob_generator(query, key, wq, bq, wk, bk, None,
                               clip_value=10.0))
    ref_nm = _reference_bf16(query, key, wq, bq, wk, bk, None, 10.0)
    assert jnp.allclose(out_nm, ref_nm, atol=2e-3, rtol=2e-3), \
        "mismatch (mask=None)"

    # --- bf16 output fast path (perf option from the review) ---
    out_bf16 = jax.block_until_ready(
        pointer_prob_generator(query, key, wq, bq, wk, bk, mask,
                               clip_value=10.0, out_dtype=jnp.bfloat16))
    assert out_bf16.dtype == jnp.bfloat16
    assert jnp.allclose(out_bf16.astype(jnp.float32), ref_bf16,
                        atol=2e-2, rtol=2e-2), "mismatch (bf16 output)"

    print("KERNEL_OK")
</pallas_src>

<mosaic_0001>
module attributes {stable_mosaic.version = 11 : i64} {
  func.func @_pointer_prob_kernel(%arg0: i32, %arg1: i32, %arg2: memref<1x8x32xf32, #tpu.memory_space<vmem>>, %arg3: memref<1x8x32xf32, #tpu.memory_space<vmem>>, %arg4: memref<32x32xbf16, #tpu.memory_space<vmem>>, %arg5: memref<1x32xf32, #tpu.memory_space<vmem>>, %arg6: memref<32x32xbf16, #tpu.memory_space<vmem>>, %arg7: memref<1x32xf32, #tpu.memory_space<vmem>>, %arg8: memref<1x8x8xi32, #tpu.memory_space<vmem>>, %arg9: memref<1x8x8xf32, #tpu.memory_space<vmem>>) attributes {dimension_semantics = [#tpu.dimension_semantics<parallel>, #tpu.dimension_semantics<parallel>], iteration_bounds = array<i64: 2, 1>, scalar_prefetch = 0 : i64, scratch_operands = 0 : i64, tpu.core_type = #tpu.core_type<tc>, window_params = [{transform_indices = @transform_0, window_bounds = array<i64: 1, 8, 32>}, {transform_indices = @transform_1, window_bounds = array<i64: 1, 8, 32>}, {pipeline_mode = #tpu.pipeline_mode<synchronous>, transform_indices = @transform_2, window_bounds = array<i64: 32, 32>}, {pipeline_mode = #tpu.pipeline_mode<synchronous>, transform_indices = @transform_3, window_bounds = array<i64: 1, 32>}, {pipeline_mode = #tpu.pipeline_mode<synchronous>, transform_indices = @transform_4, window_bounds = array<i64: 32, 32>}, {pipeline_mode = #tpu.pipeline_mode<synchronous>, transform_indices = @transform_5, window_bounds = array<i64: 1, 32>}, {transform_indices = @transform_6, window_bounds = array<i64: 1, 8, 8>}, {transform_indices = @transform_7, window_bounds = array<i64: 1, 8, 8>}]} {
    %c0 = arith.constant 0 : index
    %c0_0 = arith.constant 0 : index
    %c0_1 = arith.constant 0 : index
    %0 = vector.load %arg2[%c0, %c0_0, %c0_1] : memref<1x8x32xf32, #tpu.memory_space<vmem>>, vector<1x8x32xf32>
    %1 = vector.shape_cast %0 : vector<1x8x32xf32> to vector<8x32xf32>
    %2 = arith.truncf %1 : vector<8x32xf32> to vector<8x32xbf16>
    %c0_2 = arith.constant 0 : index
    %c0_3 = arith.constant 0 : index
    %c0_4 = arith.constant 0 : index
    %3 = vector.load %arg3[%c0_2, %c0_3, %c0_4] : memref<1x8x32xf32, #tpu.memory_space<vmem>>, vector<1x8x32xf32>
    %4 = vector.shape_cast %3 : vector<1x8x32xf32> to vector<8x32xf32>
    %5 = arith.truncf %4 : vector<8x32xf32> to vector<8x32xbf16>
    %c0_5 = arith.constant 0 : index
    %c0_6 = arith.constant 0 : index
    %6 = vector.load %arg4[%c0_5, %c0_6] : memref<32x32xbf16, #tpu.memory_space<vmem>>, vector<32x32xbf16>
    %cst = arith.constant dense<0.000000e+00> : vector<8x32xf32>
    %7 = tpu.matmul %2, %6, %cst {dimension_numbers = #tpu.dot_dimension_numbers<[1], [0], [0], [1], [0, 0, 1, 1], [], []>} : vector<8x32xbf16>, vector<32x32xbf16>, vector<8x32xf32> -> vector<8x32xf32>
    %c0_7 = arith.constant 0 : index
    %c0_8 = arith.constant 0 : index
    %8 = vector.load %arg5[%c0_7, %c0_8] : memref<1x32xf32, #tpu.memory_space<vmem>>, vector<1x32xf32>
    %9 = vector.broadcast %8 : vector<1x32xf32> to vector<8x32xf32>
    %10 = arith.addf %7, %9 : vector<8x32xf32>
    %c0_9 = arith.constant 0 : index
    %c0_10 = arith.constant 0 : index
    %11 = vector.load %arg6[%c0_9, %c0_10] : memref<32x32xbf16, #tpu.memory_space<vmem>>, vector<32x32xbf16>
    %cst_11 = arith.constant dense<0.000000e+00> : vector<8x32xf32>
    %12 = tpu.matmul %5, %11, %cst_11 {dimension_numbers = #tpu.dot_dimension_numbers<[1], [0], [0], [1], [0, 0, 1, 1], [], []>} : vector<8x32xbf16>, vector<32x32xbf16>, vector<8x32xf32> -> vector<8x32xf32>
    %c0_12 = arith.constant 0 : index
    %c0_13 = arith.constant 0 : index
    %13 = vector.load %arg7[%c0_12, %c0_13] : memref<1x32xf32, #tpu.memory_space<vmem>>, vector<1x32xf32>
    %14 = vector.broadcast %13 : vector<1x32xf32> to vector<8x32xf32>
    %15 = arith.addf %12, %14 : vector<8x32xf32>
    %16 = arith.truncf %10 : vector<8x32xf32> to vector<8x32xbf16>
    %17 = vector.shape_cast %16 : vector<8x32xbf16> to vector<1x8x32xbf16>
    %18 = arith.truncf %15 : vector<8x32xf32> to vector<8x32xbf16>
    %19 = vector.shape_cast %18 : vector<8x32xbf16> to vector<1x8x32xbf16>
    "tpu.trace_start"() <{level = 10 : i32, message = "bqd,bkd->bqk"}> : () -> ()
    %cst_14 = arith.constant dense<0.000000e+00> : vector<1x8x8xf32>
    %20 = tpu.matmul %17, %19, %cst_14 {dimension_numbers = #tpu.dot_dimension_numbers<[2], [2], [1], [1], [0, 0, 0, 1, 1, 1], [0], [0]>} : vector<1x8x32xbf16>, vector<1x8x32xbf16>, vector<1x8x8xf32> -> vector<1x8x8xf32>
    "tpu.trace_stop"() : () -> ()
    %21 = math.tanh %20 : vector<1x8x8xf32>
    %cst_15 = arith.constant 1.76776695 : f32
    %22 = vector.broadcast %cst_15 : f32 to vector<1x8x8xf32>
    %23 = arith.mulf %22, %21 : vector<1x8x8xf32>
    %c0_16 = arith.constant 0 : index
    %c0_17 = arith.constant 0 : index
    %c0_18 = arith.constant 0 : index
    %24 = vector.load %arg8[%c0_16, %c0_17, %c0_18] : memref<1x8x8xi32, #tpu.memory_space<vmem>>, vector<1x8x8xi32>
    %c0_i32 = arith.constant 0 : i32
    %25 = vector.broadcast %c0_i32 : i32 to vector<1x8x8xi32>
    %26 = arith.cmpi ne, %24, %25 : vector<1x8x8xi32>
    %cst_19 = arith.constant -1.000000e+09 : f32
    %27 = vector.broadcast %cst_19 : f32 to vector<1x8x8xf32>
    %28 = arith.select %26, %23, %27 : vector<1x8x8xi1>, vector<1x8x8xf32>
    %c0_20 = arith.constant 0 : index
    %c0_21 = arith.constant 0 : index
    %c0_22 = arith.constant 0 : index
    %29 = vector.load %arg9[%c0_20, %c0_21, %c0_22] : memref<1x8x8xf32, #tpu.memory_space<vmem>>, vector<1x8x8xf32>
    tpu.vector_store %arg9[%c0_20, %c0_21, %c0_22], %28 {strides = array<i32>} : memref<1x8x8xf32, #tpu.memory_space<vmem>>, vector<1x8x8xf32>,
    return
  }
  func.func @transform_0(%arg0: i32, %arg1: i32) -> (i32, i32, i32) {
    %c0_i32 = arith.constant 0 : i32
    %c0_i32_0 = arith.constant 0 : i32
    return %arg0, %arg1, %c0_i32 : i32, i32, i32
  }
  func.func @transform_1(%arg0: i32, %arg1: i32) -> (i32, i32, i32) {
    %c0_i32 = arith.constant 0 : i32
    %c0_i32_0 = arith.constant 0 : i32
    %c0_i32_1 = arith.constant 0 : i32
    return %arg0, %c0_i32, %c0_i32_0 : i32, i32, i32
  }
  func.func @transform_2(%arg0: i32, %arg1: i32) -> (i32, i32) {
    %c0_i32 = arith.constant 0 : i32
    %c0_i32_0 = arith.constant 0 : i32
    %c0_i32_1 = arith.constant 0 : i32
    return %c0_i32, %c0_i32_0 : i32, i32
  }
  func.func @transform_3(%arg0: i32, %arg1: i32) -> (i32, i32) {
    %c0_i32 = arith.constant 0 : i32
    %c0_i32_0 = arith.constant 0 : i32
    %c0_i32_1 = arith.constant 0 : i32
    return %c0_i32, %c0_i32_0 : i32, i32
  }
  func.func @transform_4(%arg0: i32, %arg1: i32) -> (i32, i32) {
    %c0_i32 = arith.constant 0 : i32
    %c0_i32_0 = arith.constant 0 : i32
    %c0_i32_1 = arith.constant 0 : i32
    return %c0_i32, %c0_i32_0 : i32, i32
  }
  func.func @transform_5(%arg0: i32, %arg1: i32) -> (i32, i32) {
    %c0_i32 = arith.constant 0 : i32
    %c0_i32_0 = arith.constant 0 : i32
    %c0_i32_1 = arith.constant 0 : i32
    return %c0_i32, %c0_i32_0 : i32, i32
  }
  func.func @transform_6(%arg0: i32, %arg1: i32) -> (i32, i32, i32) {
    %c0_i32 = arith.constant 0 : i32
    %c0_i32_0 = arith.constant 0 : i32
    return %arg0, %arg1, %c0_i32 : i32, i32, i32
  }
  func.func @transform_7(%arg0: i32, %arg1: i32) -> (i32, i32, i32) {
    %c0_i32 = arith.constant 0 : i32
    %c0_i32_0 = arith.constant 0 : i32
    return %arg0, %arg1, %c0_i32 : i32, i32, i32
  }
}

module attributes {stable_mosaic.version = 11 : i64} {
  func.func @_pointer_prob_kernel(%arg0: i32, %arg1: i32, %arg2: memref<1x8x32xf32, #tpu.memory_space<vmem>>, %arg3: memref<1x8x32xf32, #tpu.memory_space<vmem>>, %arg4: memref<32x32xbf16, #tpu.memory_space<vmem>>, %arg5: memref<1x32xf32, #tpu.memory_space<vmem>>, %arg6: memref<32x32xbf16, #tpu.memory_space<vmem>>, %arg7: memref<1x32xf32, #tpu.memory_space<vmem>>, %arg8: memref<1x8x8xi32, #tpu.memory_space<vmem>>, %arg9: memref<1x8x8xf32, #tpu.memory_space<vmem>>) attributes {dimension_semantics = [#tpu.dimension_semantics<parallel>, #tpu.dimension_semantics<parallel>], iteration_bounds = array<i64: 2, 1>, scalar_prefetch = 0 : i64, scratch_operands = 0 : i64, tpu.core_type = #tpu.core_type<tc>, window_params = [{transform_indices = @transform_0, window_bounds = array<i64: 1, 8, 32>}, {transform_indices = @transform_1, window_bounds = array<i64: 1, 8, 32>}, {pipeline_mode = #tpu.pipeline_mode<synchronous>, transform_indices = @transform_2, window_bounds = array<i64: 32, 32>}, {pipeline_mode = #tpu.pipeline_mode<synchronous>, transform_indices = @transform_3, window_bounds = array<i64: 1, 32>}, {pipeline_mode = #tpu.pipeline_mode<synchronous>, transform_indices = @transform_4, window_bounds = array<i64: 32, 32>}, {pipeline_mode = #tpu.pipeline_mode<synchronous>, transform_indices = @transform_5, window_bounds = array<i64: 1, 32>}, {transform_indices = @transform_6, window_bounds = array<i64: 1, 8, 8>}, {transform_indices = @transform_7, window_bounds = array<i64: 1, 8, 8>}]} {
    %c0 = arith.constant 0 : index
    %c0_0 = arith.constant 0 : index
    %c0_1 = arith.constant 0 : index
    %0 = vector.load %arg2[%c0, %c0_0, %c0_1] : memref<1x8x32xf32, #tpu.memory_space<vmem>>, vector<1x8x32xf32>
    %1 = vector.shape_cast %0 : vector<1x8x32xf32> to vector<8x32xf32>
    %2 = arith.truncf %1 : vector<8x32xf32> to vector<8x32xbf16>
    %c0_2 = arith.constant 0 : index
    %c0_3 = arith.constant 0 : index
    %c0_4 = arith.constant 0 : index
    %3 = vector.load %arg3[%c0_2, %c0_3, %c0_4] : memref<1x8x32xf32, #tpu.memory_space<vmem>>, vector<1x8x32xf32>
    %4 = vector.shape_cast %3 : vector<1x8x32xf32> to vector<8x32xf32>
    %5 = arith.truncf %4 : vector<8x32xf32> to vector<8x32xbf16>
    %c0_5 = arith.constant 0 : index
    %c0_6 = arith.constant 0 : index
    %6 = vector.load %arg4[%c0_5, %c0_6] : memref<32x32xbf16, #tpu.memory_space<vmem>>, vector<32x32xbf16>
    %cst = arith.constant dense<0.000000e+00> : vector<8x32xf32>
    %7 = tpu.matmul %2, %6, %cst {dimension_numbers = #tpu.dot_dimension_numbers<[1], [0], [0], [1], [0, 0, 1, 1], [], []>} : vector<8x32xbf16>, vector<32x32xbf16>, vector<8x32xf32> -> vector<8x32xf32>
    %c0_7 = arith.constant 0 : index
    %c0_8 = arith.constant 0 : index
    %8 = vector.load %arg5[%c0_7, %c0_8] : memref<1x32xf32, #tpu.memory_space<vmem>>, vector<1x32xf32>
    %9 = vector.broadcast %8 : vector<1x32xf32> to vector<8x32xf32>
    %10 = arith.addf %7, %9 : vector<8x32xf32>
    %c0_9 = arith.constant 0 : index
    %c0_10 = arith.constant 0 : index
    %11 = vector.load %arg6[%c0_9, %c0_10] : memref<32x32xbf16, #tpu.memory_space<vmem>>, vector<32x32xbf16>
    %cst_11 = arith.constant dense<0.000000e+00> : vector<8x32xf32>
    %12 = tpu.matmul %5, %11, %cst_11 {dimension_numbers = #tpu.dot_dimension_numbers<[1], [0], [0], [1], [0, 0, 1, 1], [], []>} : vector<8x32xbf16>, vector<32x32xbf16>, vector<8x32xf32> -> vector<8x32xf32>
    %c0_12 = arith.constant 0 : index
    %c0_13 = arith.constant 0 : index
    %13 = vector.load %arg7[%c0_12, %c0_13] : memref<1x32xf32, #tpu.memory_space<vmem>>, vector<1x32xf32>
    %14 = vector.broadcast %13 : vector<1x32xf32> to vector<8x32xf32>
    %15 = arith.addf %12, %14 : vector<8x32xf32>
    %16 = arith.truncf %10 : vector<8x32xf32> to vector<8x32xbf16>
    %17 = vector.shape_cast %16 : vector<8x32xbf16> to vector<1x8x32xbf16>
    %18 = arith.truncf %15 : vector<8x32xf32> to vector<8x32xbf16>
    %19 = vector.shape_cast %18 : vector<8x32xbf16> to vector<1x8x32xbf16>
    "tpu.trace_start"() <{level = 10 : i32, message = "bqd,bkd->bqk"}> : () -> ()
    %cst_14 = arith.constant dense<0.000000e+00> : vector<1x8x8xf32>
    %20 = tpu.matmul %17, %19, %cst_14 {dimension_numbers = #tpu.dot_dimension_numbers<[2], [2], [1], [1], [0, 0, 0, 1, 1, 1], [0], [0]>} : vector<1x8x32xbf16>, vector<1x8x32xbf16>, vector<1x8x8xf32> -> vector<1x8x8xf32>
    "tpu.trace_stop"() : () -> ()
    %21 = math.tanh %20 : vector<1x8x8xf32>
    %cst_15 = arith.constant 1.76776695 : f32
    %22 = vector.broadcast %cst_15 : f32 to vector<1x8x8xf32>
    %23 = arith.mulf %22, %21 : vector<1x8x8xf32>
    %c0_16 = arith.constant 0 : index
    %c0_17 = arith.constant 0 : index
    %c0_18 = arith.constant 0 : index
    %24 = vector.load %arg8[%c0_16, %c0_17, %c0_18] : memref<1x8x8xi32, #tpu.memory_space<vmem>>, vector<1x8x8xi32>
    %c0_i32 = arith.constant 0 : i32
    %25 = vector.broadcast %c0_i32 : i32 to vector<1x8x8xi32>
    %26 = arith.cmpi ne, %24, %25 : vector<1x8x8xi32>
    %cst_19 = arith.constant -1.000000e+09 : f32
    %27 = vector.broadcast %cst_19 : f32 to vector<1x8x8xf32>
    %28 = arith.select %26, %23, %27 : vector<1x8x8xi1>, vector<1x8x8xf32>
    %c0_20 = arith.constant 0 : index
    %c0_21 = arith.constant 0 : index
    %c0_22 = arith.constant 0 : index
    %29 = vector.load %arg9[%c0_20, %c0_21, %c0_22] : memref<1x8x8xf32, #tpu.memory_space<vmem>>, vector<1x8x8xf32>
    tpu.vector_store %arg9[%c0_20, %c0_21, %c0_22], %28 {strides = array<i32>} : memref<1x8x8xf32, #tpu.memory_space<vmem>>, vector<1x8x8xf32>,
    return
  }
  func.func @transform_0(%arg0: i32, %arg1: i32) -> (i32, i32, i32) {
    %c0_i32 = arith.constant 0 : i32
    %c0_i32_0 = arith.constant 0 : i32
    return %arg0, %arg1, %c0_i32 : i32, i32, i32
  }
  func.func @transform_1(%arg0: i32, %arg1: i32) -> (i32, i32, i32) {
    %c0_i32 = arith.constant 0 : i32
    %c0_i32_0 = arith.constant 0 : i32
    %c0_i32_1 = arith.constant 0 : i32
    return %arg0, %c0_i32, %c0_i32_0 : i32, i32, i32
  }
  func.func @transform_2(%arg0: i32, %arg1: i32) -> (i32, i32) {
    %c0_i32 = arith.constant 0 : i32
    %c0_i32_0 = arith.constant 0 : i32
    %c0_i32_1 = arith.constant 0 : i32
    return %c0_i32, %c0_i32_0 : i32, i32
  }
  func.func @transform_3(%arg0: i32, %arg1: i32) -> (i32, i32) {
    %c0_i32 = arith.constant 0 : i32
    %c0_i32_0 = arith.constant 0 : i32
    %c0_i32_1 = arith.constant 0 : i32
    return %c0_i32, %c0_i32_0 : i32, i32
  }
  func.func @transform_4(%arg0: i32, %arg1: i32) -> (i32, i32) {
    %c0_i32 = arith.constant 0 : i32
    %c0_i32_0 = arith.constant 0 : i32
    %c0_i32_1 = arith.constant 0 : i32
    return %c0_i32, %c0_i32_0 : i32, i32
  }
  func.func @transform_5(%arg0: i32, %arg1: i32) -> (i32, i32) {
    %c0_i32 = arith.constant 0 : i32
    %c0_i32_0 = arith.constant 0 : i32
    %c0_i32_1 = arith.constant 0 : i32
    return %c0_i32, %c0_i32_0 : i32, i32
  }
  func.func @transform_6(%arg0: i32, %arg1: i32) -> (i32, i32, i32) {
    %c0_i32 = arith.constant 0 : i32
    %c0_i32_0 = arith.constant 0 : i32
    return %arg0, %arg1, %c0_i32 : i32, i32, i32
  }
  func.func @transform_7(%arg0: i32, %arg1: i32) -> (i32, i32, i32) {
    %c0_i32 = arith.constant 0 : i32
    %c0_i32_0 = arith.constant 0 : i32
    return %arg0, %arg1, %c0_i32 : i32, i32, i32
  }
}

</mosaic_0001>

<llo_original>
// kernel: tpu_custom_call.1
$region0: #{tpu_custom_call.1}
  #allocation0 [shape = 'u32[]', space=smem, size = 0x4, offset = 0x4, fixed_abs, tag = 'smem constant byte address 0x4 - core index']
  #allocation1 [shape = 'u32[144,128]{1,0:T(1,128)}', space=vmem, size = 0x12000, scoped, tag = 'internal scratch']
  %s0 = inlined_call_operand.hbm [shape: f32[2,8,32], index: 0, kind: input, shape index: {}]
  %s1 = inlined_call_operand.hbm [shape: f32[2,8,32], index: 1, kind: input, shape index: {}]
  %s2 = inlined_call_operand.hbm [shape: bf16[32,32], index: 2, kind: input, shape index: {}]
  %s3 = inlined_call_operand.vmem [shape: f32[1,32], index: 3, kind: input, shape index: {}]
  %s4 = inlined_call_operand.hbm [shape: bf16[32,32], index: 4, kind: input, shape index: {}]
  %s5 = inlined_call_operand.vmem [shape: f32[1,32], index: 5, kind: input, shape index: {}]
  %s6 = inlined_call_operand.hbm [shape: s32[2,8,8], index: 6, kind: input, shape index: {}]
  %s7 = inlined_call_operand.hbm [shape: f32[2,8,8], index: 7, kind: output, shape index: {}]
  %s8 = sld [smem:[#allocation0]]
  $region81: #{tpu_custom_call.1} parent=0
    _
  %s10 = ssub.s32 1, %s8
  %s11 = scalar_select 0, %s10, %s8
  $region1: #{tpu_custom_call.1} parent=0
    #allocation2 [shape = 'u8[8192]{0}', space=vmem, size = 0x2000, scoped, tag = 'input window, operand 0']
    #allocation3 [shape = 's32[2]{0}', space=sflag, size = 0x8, scoped, tag = 'scoped memory for tpu_custom_call.1']
    #allocation4 [shape = 's32[2]{0}', space=sflag, size = 0x8, scoped, tag = 'scoped memory for tpu_custom_call.1']
    #allocation5 [shape = 'u8[8192]{0}', space=vmem, size = 0x2000, scoped, tag = 'input window, operand 1']
    #allocation6 [shape = 's32[2]{0}', space=sflag, size = 0x8, scoped, tag = 'scoped memory for tpu_custom_call.1']
    #allocation7 [shape = 'u8[8192]{0}', space=vmem, size = 0x2000, scoped, tag = 'input window, operand 2, single buffered']
    #allocation8 [shape = 'u8[8192]{0}', space=vmem, size = 0x2000, scoped, tag = 'input window, operand 4, single buffered']
    #allocation9 [shape = 's32[1]{0}', space=sflag, size = 0x4, scoped, tag = 'scoped memory for tpu_custom_call.1']
    #allocation10 [shape = 'u8[8192]{0}', space=vmem, size = 0x2000, scoped, tag = 'input window, operand 6']
    #allocation11 [shape = 'u8[8192]{0}', space=vmem, size = 0x2000, scoped, tag = 'output window, operand 0']
    %12 = vsyncpa [#allocation3], 0
    %s13 = scalar_lea.sflag [#allocation3], 1
    %14 = vsyncpa %s13, 0
    %15 = vsyncpa [#allocation6], 0
    %s16 = scalar_lea.sflag [#allocation6], 1
    %17 = vsyncpa %s16, 0
    %18 = vsyncpa [#allocation9], 0
    %19 = vsyncpa [#allocation4], 0
    %s20 = scalar_lea.sflag [#allocation4], 1
    %21 = vsyncpa %s20, 0
    loop: start=0, step=1, limit=4
    $region2: #{tpu_custom_call.1} parent=1 // loop_pre_header
      _
    $region3: #{tpu_custom_call.1} parent=1 // loop_header
      %s23 = sphi 0, %s27
      %p24 = scmp.ge.s32.totalorder %s23, 4
      %s30 = sphi 0, %s42
      %s31 = sphi 0, %s38
      %s32 = sphi 0, %s30
      %s33 = sphi 0, %s31
      %s34 = sphi 0, %s32
      %s35 = sphi 0, %s33
      %s47 = sphi 0, %s49
      %s50 = sphi 0, %s47
      %s51 = sphi 0, %s50
      %s67 = sphi 0, %s51
      %s73 = sphi 0, %s75
      %s76 = sphi 0, %s73
      %s77 = sphi 0, %s76
      %s93 = sphi 0, %s77
      %s97 = sphi 0, %s97
      %s99 = sphi 0, %s97
      %s100 = sphi 0, %s99
      %s114 = sphi 0, %s100
      %s118 = sphi 0, %s118
      %s120 = sphi 0, %s118
      %s121 = sphi 0, %s120
      %s135 = sphi 0, %s121
      %s139 = sphi 0, %s139
      %s141 = sphi 0, %s139
      %s142 = sphi 0, %s141
      %s156 = sphi 0, %s142
      %s160 = sphi 0, %s160
      %s162 = sphi 0, %s160
      %s163 = sphi 0, %s162
      %s177 = sphi 0, %s163
      %s185 = sphi 0, %s187
      %s188 = sphi 0, %s185
      %s189 = sphi 0, %s188
      %s205 = sphi 0, %s189
      %s213 = sphi 0, %s215
      %s216 = sphi 0, %s213
      %s217 = sphi 0, %s216
      %s233 = sphi 0, %s217
    $region4: #{tpu_custom_call.1} parent=1 // loop_header_branch
      %26 = sbr.rel (%p24) target = $region8
    $region5: #{tpu_custom_call.1} parent=1 // loop_body
      %s28 = ssub.s32 %s23, 1
      %s29 = ssub.s32 %s23, 2
      %s36 = sadd.s32 1, %s31
      %p37 = scmp.ge.s32.totalorder %s36, 1
      %s38 = scalar_select %p37, 0, %s36
      %s39 = sadd.s32 1, %s30
      %s40 = scalar_select %p37, %s39, %s30
      %p41 = scmp.ge.s32.totalorder %s40, 2
      %s42 = scalar_select %p41, 0, %s40
      %s43 = ssub.s32 %s30, %s42
      %s44 = ssub.s32 %s31, %s38
      %s45 = sor.u32 %s43, %s44
      %p46 = scmp.eq.s32.totalorder %s45, 0
      %s48 = sadd.s32 %s47, 1
      %s49 = scalar_select %p46, %s47, %s48
      %p52 = pneg %p46
      %p53 = scmp.eq.s32.totalorder %s23, 1
      %p54 = por %p52, %p53
      %p55 = scmp.ne.s32.totalorder %s47, %s50
      %p56 = scmp.eq.s32.totalorder %s23, 0
      %p57 = por %p55, %p56
      %p58 = scmp.ne.s32.totalorder %s47, %s50
      %p59 = scmp.eq.s32.totalorder %s28, 1
      %p60 = por %p58, %p59
      %p61 = scmp.ne.s32.totalorder %s50, %s51
      %p62 = scmp.eq.s32.totalorder %s28, 0
      %p63 = por %p61, %p62
      %p64 = scmp.ne.s32.totalorder %s50, %s51
      %p65 = scmp.eq.s32.totalorder %s29, 1
      %p66 = por %p64, %p65
      %p68 = scmp.ne.s32.totalorder %s51, %s67
      %p69 = scmp.eq.s32.totalorder %s29, 0
      %p70 = por %p68, %p69
      %s71 = ssub.s32 %s30, %s42
      %p72 = scmp.eq.s32.totalorder %s71, 0
      %s74 = sadd.s32 %s73, 1
      %s75 = scalar_select %p72, %s73, %s74
      %p78 = pneg %p72
      %p79 = scmp.eq.s32.totalorder %s23, 1
      %p80 = por %p78, %p79
      %p81 = scmp.ne.s32.totalorder %s73, %s76
      %p82 = scmp.eq.s32.totalorder %s23, 0
      %p83 = por %p81, %p82
      %p84 = scmp.ne.s32.totalorder %s73, %s76
      %p85 = scmp.eq.s32.totalorder %s28, 1
      %p86 = por %p84, %p85
      %p87 = scmp.ne.s32.totalorder %s76, %s77
      %p88 = scmp.eq.s32.totalorder %s28, 0
      %p89 = por %p87, %p88
      %p90 = scmp.ne.s32.totalorder %s76, %s77
      %p91 = scmp.eq.s32.totalorder %s29, 1
      %p92 = por %p90, %p91
      %p94 = scmp.ne.s32.totalorder %s77, %s93
      %p95 = scmp.eq.s32.totalorder %s29, 0
      %p96 = por %p94, %p95
      %s98 = sadd.s32 %s97, 1
      %p101 = scmp.eq.s32.totalorder %s23, 1
      %p102 = scmp.ne.s32.totalorder %s97, %s99
      %p103 = scmp.eq.s32.totalorder %s23, 0
      %p104 = por %p102, %p103
      %p105 = scmp.ne.s32.totalorder %s97, %s99
      %p106 = scmp.eq.s32.totalorder %s28, 1
      %p107 = por %p105, %p106
      %p108 = scmp.ne.s32.totalorder %s99, %s100
      %p109 = scmp.eq.s32.totalorder %s28, 0
      %p110 = por %p108, %p109
      %p111 = scmp.ne.s32.totalorder %s99, %s100
      %p112 = scmp.eq.s32.totalorder %s29, 1
      %p113 = por %p111, %p112
      %p115 = scmp.ne.s32.totalorder %s100, %s114
      %p116 = scmp.eq.s32.totalorder %s29, 0
      %p117 = por %p115, %p116
      %s119 = sadd.s32 %s118, 1
      %p122 = scmp.eq.s32.totalorder %s23, 1
      %p123 = scmp.ne.s32.totalorder %s118, %s120
      %p124 = scmp.eq.s32.totalorder %s23, 0
      %p125 = por %p123, %p124
      %p126 = scmp.ne.s32.totalorder %s118, %s120
      %p127 = scmp.eq.s32.totalorder %s28, 1
      %p128 = por %p126, %p127
      %p129 = scmp.ne.s32.totalorder %s120, %s121
      %p130 = scmp.eq.s32.totalorder %s28, 0
      %p131 = por %p129, %p130
      %p132 = scmp.ne.s32.totalorder %s120, %s121
      %p133 = scmp.eq.s32.totalorder %s29, 1
      %p134 = por %p132, %p133
      %p136 = scmp.ne.s32.totalorder %s121, %s135
      %p137 = scmp.eq.s32.totalorder %s29, 0
      %p138 = por %p136, %p137
      %s140 = sadd.s32 %s139, 1
      %p143 = scmp.eq.s32.totalorder %s23, 1
      %p144 = scmp.ne.s32.totalorder %s139, %s141
      %p145 = scmp.eq.s32.totalorder %s23, 0
      %p146 = por %p144, %p145
      %p147 = scmp.ne.s32.totalorder %s139, %s141
      %p148 = scmp.eq.s32.totalorder %s28, 1
      %p149 = por %p147, %p148
      %p150 = scmp.ne.s32.totalorder %s141, %s142
      %p151 = scmp.eq.s32.totalorder %s28, 0
      %p152 = por %p150, %p151
      %p153 = scmp.ne.s32.totalorder %s141, %s142
      %p154 = scmp.eq.s32.totalorder %s29, 1
      %p155 = por %p153, %p154
      %p157 = scmp.ne.s32.totalorder %s142, %s156
      %p158 = scmp.eq.s32.totalorder %s29, 0
      %p159 = por %p157, %p158
      %s161 = sadd.s32 %s160, 1
      %p164 = scmp.eq.s32.totalorder %s23, 1
      %p165 = scmp.ne.s32.totalorder %s160, %s162
      %p166 = scmp.eq.s32.totalorder %s23, 0
      %p167 = por %p165, %p166
      %p168 = scmp.ne.s32.totalorder %s160, %s162
      %p169 = scmp.eq.s32.totalorder %s28, 1
      %p170 = por %p168, %p169
      %p171 = scmp.ne.s32.totalorder %s162, %s163
      %p172 = scmp.eq.s32.totalorder %s28, 0
      %p173 = por %p171, %p172
      %p174 = scmp.ne.s32.totalorder %s162, %s163
      %p175 = scmp.eq.s32.totalorder %s29, 1
      %p176 = por %p174, %p175
      %p178 = scmp.ne.s32.totalorder %s163, %s177
      %p179 = scmp.eq.s32.totalorder %s29, 0
      %p180 = por %p178, %p179
      %s181 = ssub.s32 %s30, %s42
      %s182 = ssub.s32 %s31, %s38
      %s183 = sor.u32 %s181, %s182
      %p184 = scmp.eq.s32.totalorder %s183, 0
      %s186 = sadd.s32 %s185, 1
      %s187 = scalar_select %p184, %s185, %s186
      %p190 = pneg %p184
      %p191 = scmp.eq.s32.totalorder %s23, 1
      %p192 = por %p190, %p191
      %p193 = scmp.ne.s32.totalorder %s185, %s188
      %p194 = scmp.eq.s32.totalorder %s23, 0
      %p195 = por %p193, %p194
      %p196 = scmp.ne.s32.totalorder %s185, %s188
      %p197 = scmp.eq.s32.totalorder %s28, 1
      %p198 = por %p196, %p197
      %p199 = scmp.ne.s32.totalorder %s188, %s189
      %p200 = scmp.eq.s32.totalorder %s28, 0
      %p201 = por %p199, %p200
      %p202 = scmp.ne.s32.totalorder %s188, %s189
      %p203 = scmp.eq.s32.totalorder %s29, 1
      %p204 = por %p202, %p203
      %p206 = scmp.ne.s32.totalorder %s189, %s205
      %p207 = scmp.eq.s32.totalorder %s29, 0
      %p208 = por %p206, %p207
      %s209 = ssub.s32 %s30, %s42
      %s210 = ssub.s32 %s31, %s38
      %s211 = sor.u32 %s209, %s210
      %p212 = scmp.eq.s32.totalorder %s211, 0
      %s214 = sadd.s32 %s213, 1
      %s215 = scalar_select %p212, %s213, %s214
      %p218 = pneg %p212
      %p219 = scmp.eq.s32.totalorder %s23, 1
      %p220 = por %p218, %p219
      %p221 = scmp.ne.s32.totalorder %s213, %s216
      %p222 = scmp.eq.s32.totalorder %s23, 0
      %p223 = por %p221, %p222
      %p224 = scmp.ne.s32.totalorder %s213, %s216
      %p225 = scmp.eq.s32.totalorder %s28, 1
      %p226 = por %p224, %p225
      %p227 = scmp.ne.s32.totalorder %s216, %s217
      %p228 = scmp.eq.s32.totalorder %s28, 0
      %p229 = por %p227, %p228
      %p230 = scmp.ne.s32.totalorder %s216, %s217
      %p231 = scmp.eq.s32.totalorder %s29, 1
      %p232 = por %p230, %p231
      %p234 = scmp.ne.s32.totalorder %s217, %s233
      %p235 = scmp.eq.s32.totalorder %s29, 0
      %p236 = por %p234, %p235
      %p237 = scmp.le.s32.totalorder 1, %s23
      %p238 = scmp.lt.s32.totalorder %s23, 3
      %p239 = pnand %p237, %p238
      %p240 = pneg %p239
      // Predicated region
      $region9: #{tpu_custom_call.1} parent=5 // pred_check
        _
      $region10: #{tpu_custom_call.1} parent=5 // pred_check_branch
        %242 = sbr.rel (%p239) target = $region12
      $region11: #{tpu_custom_call.1} parent=5 // pred_region
        %s243 = ssub.s32 %s23, 1
        // Predicated region
        $region13: #{tpu_custom_call.1} parent=11 // pred_check
          %p244 = pneg %p110
        $region14: #{tpu_custom_call.1} parent=11 // pred_check_branch
          %246 = sbr.rel (%p244) target = $region16
        $region15: #{tpu_custom_call.1} parent=11 // pred_region
          %s248 = ssub.s32 256, 256
          %249 = vsyncadd [#allocation6], %s248
          %s250 = sshll.u32 [#allocation7], 4
          %s251 = int_to_ptr.vmem [resolvable:$true] %s250
          %256 = dma.hbm_to_vmem [thread:$0]  %s2, 256, %s251, [#allocation6], 64, 64, 4
        $region16: #{tpu_custom_call.1} parent=11 // pred_fallthru
          _
        // Predicated region
        $region17: #{tpu_custom_call.1} parent=11 // pred_check
          %p257 = pneg %p131
        $region18: #{tpu_custom_call.1} parent=11 // pred_check_branch
          %259 = sbr.rel (%p257) target = $region20
        $region19: #{tpu_custom_call.1} parent=11 // pred_region
          _
        $region20: #{tpu_custom_call.1} parent=11 // pred_fallthru
          _
        // Predicated region
        $region21: #{tpu_custom_call.1} parent=11 // pred_check
          %p260 = pneg %p152
        $region22: #{tpu_custom_call.1} parent=11 // pred_check_branch
          %262 = sbr.rel (%p260) target = $region24
        $region23: #{tpu_custom_call.1} parent=11 // pred_region
          %s264 = ssub.s32 256, 256
          %265 = vsyncadd [#allocation9], %s264
          %s266 = sshll.u32 [#allocation8], 4
          %s267 = int_to_ptr.vmem [resolvable:$true] %s266
          %272 = dma.hbm_to_vmem [thread:$0]  %s4, 256, %s267, [#allocation9], 64, 64, 4
        $region24: #{tpu_custom_call.1} parent=11 // pred_fallthru
          _
        // Predicated region
        $region25: #{tpu_custom_call.1} parent=11 // pred_check
          %p273 = pneg %p173
        $region26: #{tpu_custom_call.1} parent=11 // pred_check_branch
          %275 = sbr.rel (%p273) target = $region28
        $region27: #{tpu_custom_call.1} parent=11 // pred_region
          _
        $region28: #{tpu_custom_call.1} parent=11 // pred_fallthru
          _
      $region12: #{tpu_custom_call.1} parent=5 // pred_fallthru
        _
      %p276 = scmp.lt.s32.totalorder %s23, 2
      // Predicated region
      $region29: #{tpu_custom_call.1} parent=5 // pred_check
        %p277 = pneg %p276
      $region30: #{tpu_custom_call.1} parent=5 // pred_check_branch
        %279 = sbr.rel (%p277) target = $region32
      $region31: #{tpu_custom_call.1} parent=5 // pred_region
        // Predicated region
        $region33: #{tpu_custom_call.1} parent=31 // pred_check
          %p280 = pneg %p57
        $region34: #{tpu_custom_call.1} parent=31 // pred_check_branch
          %282 = sbr.rel (%p280) target = $region36
        $region35: #{tpu_custom_call.1} parent=31 // pred_region
          %s283 = sand.u32 %s23, 1
          %s284 = scalar_lea.sflag [#allocation3], %s283
          %s285 = sand.u32 %s47, 1
          %s286 = smul.addr %s285, 8
          %s287 = scalar_lea.vmem [#allocation2], %s286
          %s289 = ssub.s32 128, 128
          %290 = vsyncadd %s284, %s289
          %s291 = sadd.s32 %s31, %s30
          %s292 = smul.addr %s291, 128
          %s293 = scalar_lea.hbm %s0, %s292
          %s295 = sshll.u32 %s287, 4
          %s296 = int_to_ptr.vmem [resolvable:$true] %s295
          %298 = dma.hbm_to_vmem [thread:$0]  %s293, 128, %s296, %s284
        $region36: #{tpu_custom_call.1} parent=31 // pred_fallthru
          _
        // Predicated region
        $region37: #{tpu_custom_call.1} parent=31 // pred_check
          %p299 = pneg %p83
        $region38: #{tpu_custom_call.1} parent=31 // pred_check_branch
          %301 = sbr.rel (%p299) target = $region40
        $region39: #{tpu_custom_call.1} parent=31 // pred_region
          %s302 = sand.u32 %s23, 1
          %s303 = scalar_lea.sflag [#allocation6], %s302
          %s304 = sand.u32 %s73, 1
          %s305 = smul.addr %s304, 8
          %s306 = scalar_lea.vmem [#allocation5], %s305
          %s308 = ssub.s32 128, 128
          %309 = vsyncadd %s303, %s308
          %s310 = smul.addr %s30, 128
          %s311 = scalar_lea.hbm %s1, %s310
          %s313 = sshll.u32 %s306, 4
          %s314 = int_to_ptr.vmem [resolvable:$true] %s313
          %316 = dma.hbm_to_vmem [thread:$0]  %s311, 128, %s314, %s303
        $region40: #{tpu_custom_call.1} parent=31 // pred_fallthru
          _
        // Predicated region
        $region41: #{tpu_custom_call.1} parent=31 // pred_check
          %p317 = pneg %p195
        $region42: #{tpu_custom_call.1} parent=31 // pred_check_branch
          %319 = sbr.rel (%p317) target = $region44
        $region43: #{tpu_custom_call.1} parent=31 // pred_region
          %s320 = sand.u32 %s23, 1
          %s321 = scalar_lea.sflag [#allocation3], %s320
          %s322 = sand.u32 %s185, 1
          %s323 = smul.addr %s322, 8
          %s324 = scalar_lea.vmem [#allocation10], %s323
          %s326 = ssub.s32 128, 128
          %327 = vsyncadd %s321, %s326
          %s328 = sadd.s32 %s31, %s30
          %s329 = smul.addr %s328, 128
          %s330 = scalar_lea.hbm %s6, %s329
          %s332 = sshll.u32 %s324, 4
          %s333 = int_to_ptr.vmem [resolvable:$true] %s332
          %335 = dma.hbm_to_vmem [thread:$0]  %s330, 128, %s333, %s321
        $region44: #{tpu_custom_call.1} parent=31 // pred_fallthru
          _
      $region32: #{tpu_custom_call.1} parent=5 // pred_fallthru
        _
      %p336 = scmp.le.s32.totalorder 1, %s23
      %p337 = scmp.lt.s32.totalorder %s23, 3
      %p338 = pnand %p336, %p337
      %p339 = pneg %p338
      // Predicated region
      $region45: #{tpu_custom_call.1} parent=5 // pred_check
        _
      $region46: #{tpu_custom_call.1} parent=5 // pred_check_branch
        %341 = sbr.rel (%p338) target = $region48
      $region47: #{tpu_custom_call.1} parent=5 // pred_region
        %s342 = ssub.s32 %s23, 1
        %s343 = sand.u32 %s28, 1
        %s344 = scalar_lea.sflag [#allocation3], %s343
        %s345 = sand.u32 %s50, 1
        %s346 = smul.addr %s345, 8
        %s347 = scalar_lea.vmem [#allocation2], %s346
        // Predicated region
        $region49: #{tpu_custom_call.1} parent=47 // pred_check
          %p348 = pneg %p63
        $region50: #{tpu_custom_call.1} parent=47 // pred_check_branch
          %350 = sbr.rel (%p348) target = $region52
        $region51: #{tpu_custom_call.1} parent=47 // pred_region
          %351 = dma.done %s344, 128
        $region52: #{tpu_custom_call.1} parent=47 // pred_fallthru
          _
        %s352 = sand.u32 %s28, 1
        %s353 = scalar_lea.sflag [#allocation6], %s352
        %s354 = sand.u32 %s76, 1
        %s355 = smul.addr %s354, 8
        %s356 = scalar_lea.vmem [#allocation5], %s355
        // Predicated region
        $region53: #{tpu_custom_call.1} parent=47 // pred_check
          %p357 = pneg %p89
        $region54: #{tpu_custom_call.1} parent=47 // pred_check_branch
          %359 = sbr.rel (%p357) target = $region56
        $region55: #{tpu_custom_call.1} parent=47 // pred_region
          %360 = dma.done %s353, 128
        $region56: #{tpu_custom_call.1} parent=47 // pred_fallthru
          _
        // Predicated region
        $region57: #{tpu_custom_call.1} parent=47 // pred_check
          %p361 = pneg %p110
        $region58: #{tpu_custom_call.1} parent=47 // pred_check_branch
          %363 = sbr.rel (%p361) target = $region60
        $region59: #{tpu_custom_call.1} parent=47 // pred_region
          %364 = dma.done [#allocation6], 256
        $region60: #{tpu_custom_call.1} parent=47 // pred_fallthru
          _
        // Predicated region
        $region61: #{tpu_custom_call.1} parent=47 // pred_check
          %p365 = pneg %p152
        $region62: #{tpu_custom_call.1} parent=47 // pred_check_branch
          %367 = sbr.rel (%p365) target = $region64
        $region63: #{tpu_custom_call.1} parent=47 // pred_region
          %368 = dma.done [#allocation9], 256
        $region64: #{tpu_custom_call.1} parent=47 // pred_fallthru
          _
        %s369 = sand.u32 %s28, 1
        %s370 = scalar_lea.sflag [#allocation3], %s369
        %s371 = sand.u32 %s188, 1
        %s372 = smul.addr %s371, 8
        %s373 = scalar_lea.vmem [#allocation10], %s372
        // Predicated region
        $region65: #{tpu_custom_call.1} parent=47 // pred_check
          %p374 = pneg %p201
        $region66: #{tpu_custom_call.1} parent=47 // pred_check_branch
          %376 = sbr.rel (%p374) target = $region68
        $region67: #{tpu_custom_call.1} parent=47 // pred_region
          %377 = dma.done %s370, 128
        $region68: #{tpu_custom_call.1} parent=47 // pred_fallthru
          _
        %s378 = sand.u32 %s28, 1
        %s379 = scalar_lea.sflag [#allocation3], %s378
        %s380 = sand.u32 %s50, 1
        %s381 = smul.addr %s380, 8
        %s382 = scalar_lea.vmem [#allocation2], %s381
        %p383 = pneg %p63
        %p384 = pneg %p60
        %s385 = sand.u32 %s28, 1
        %s386 = scalar_lea.sflag [#allocation6], %s385
        %s387 = sand.u32 %s76, 1
        %s388 = smul.addr %s387, 8
        %s389 = scalar_lea.vmem [#allocation5], %s388
        %p390 = pneg %p89
        %p391 = pneg %p86
        %p392 = pneg %p110
        %p393 = pneg %p107
        %p394 = pneg %p131
        %p395 = pneg %p128
        %p396 = pneg %p152
        %p397 = pneg %p149
        %p398 = pneg %p173
        %p399 = pneg %p170
        %s400 = sand.u32 %s28, 1
        %s401 = scalar_lea.sflag [#allocation3], %s400
        %s402 = sand.u32 %s188, 1
        %s403 = smul.addr %s402, 8
        %s404 = scalar_lea.vmem [#allocation10], %s403
        %p405 = pneg %p201
        %p406 = pneg %p198
        %p407 = pneg %p229
        %p408 = pneg %p226
        %s409 = sand.u32 %s216, 1
        %s410 = scalar_lea.sflag [#allocation4], %s409
        %s411 = sand.u32 %s216, 1
        %s412 = smul.addr %s411, 8
        %s413 = scalar_lea.vmem [#allocation11], %s412
        %v415 = vld [vmem:[%s347] sm:$0xff]
        %v416 = vpack.c.bf16 %v415, %v415
        %v417 = vld [vmem:[%s356] sm:$0xff]
        %v418 = vpack.c.bf16 %v417, %v417
        %v419 = vld [vmem:[#allocation7] sm:$0xf]
        %v420 = vld [vmem:[#allocation7 + $0x4] sm:$0xf]
        %v421 = vld [vmem:[#allocation7 + $0x8] sm:$0xf]
        %v422 = vld [vmem:[#allocation7 + $0xc] sm:$0xf]
        %v423 = vld [vmem:[%s3] sm:$0x1]
        %v425 = vlaneseq
        %v426 = vshrl.u32 %v425, 7
        %v427 = vsub.s32 0, %v426
        %v428 = vrot.slane %v423, %v427
        %v434 = vunpack.c.l.b16 %v419
        %v435 = vunpack.c.l.b16 %v420
        %v436 = vunpack.c.l.b16 %v421
        %v437 = vunpack.c.l.b16 %v422
        %v438 = vpack.c.b16 %v435, %v434
        %v439 = vpack.c.b16 %v437, %v436
        %vm442 = vcmask 261120
        %v444 = vsel %vm442, %v416, 0
        %446 = vmatprep.subr.bf16.mxu0 0
        %447 = vmatpush1.bf16.msra.mxu0 0
        %448 = vmatprep.subr.bf16.mxu0 0
        %449 = vmatpush1.bf16.msra.mxu0 0
        %450 = vmatprep.subr.bf16.mxu0 0
        %451 = vmatpush1.bf16.msra.mxu0 0
        %452 = vmatprep.subr.bf16.mxu0 0
        %453 = vmatpush1.bf16.msra.mxu0 0
        %454 = vmatprep.subr.bf16.mxu0 0
        %455 = vmatpush1.bf16.msra.mxu0 0
        %456 = vmatprep.subr.bf16.mxu0 0
        %457 = vmatpush1.bf16.msra.mxu0 0
        %458 = vmatprep.subr.bf16.mxu0 0
        %459 = vmatpush1.bf16.msra.mxu0 %v439
        %460 = vmatprep.subr.bf16.mxu0 0
        %461 = vmatpush1.bf16.msra.mxu0 %v438
        %462 = vmatprep.subr.bf16.mxu0 0
        %463 = vmatpush2.bf16.msra.mxu0 0
        %464 = vmatprep.subr.bf16.mxu0 0
        %465 = vmatpush2.bf16.msra.mxu0 0
        %466 = vmatprep.subr.bf16.mxu0 0
        %467 = vmatpush2.bf16.msra.mxu0 0
        %468 = vmatprep.subr.bf16.mxu0 0
        %469 = vmatpush2.bf16.msra.mxu0 0
        %470 = vmatprep.subr.bf16.mxu0 0
        %471 = vmatpush2.bf16.msra.mxu0 0
        %472 = vmatprep.subr.bf16.mxu0 0
        %473 = vmatpush2.bf16.msra.mxu0 0
        %474 = vmatprep.subr.bf16.mxu0 0
        %475 = vmatpush2.bf16.msra.mxu0 0
        %476 = vmatprep.subr.bf16.mxu0 0
        %477 = vmatpush2.bf16.msra.mxu0 0
        %478 = vmatprep.mubr.bf16.mxu0 0
        %479 = vmatmul.mubr.bf16.gmra.mxu0 %v444
        %v480 = vpop.f32.mrf.mxu0
        %v481 = vadd.f32 %v428, %v480
        %v482 = vpop.f32.mrf.mxu0
        %v483 = vpop.f32.mrf.mxu0
        %v484 = vpop.f32.mrf.mxu0
        %485 = vdwg.mxu0
        %v486 = vld [vmem:[#allocation8] sm:$0xf]
        %v487 = vld [vmem:[#allocation8 + $0x4] sm:$0xf]
        %v488 = vld [vmem:[#allocation8 + $0x8] sm:$0xf]
        %v489 = vld [vmem:[#allocation8 + $0xc] sm:$0xf]
        %v490 = vld [vmem:[%s5] sm:$0x1]
        %v492 = vlaneseq
        %v493 = vshrl.u32 %v492, 7
        %v494 = vsub.s32 0, %v493
        %v495 = vrot.slane %v490, %v494
        %v501 = vunpack.c.l.b16 %v486
        %v502 = vunpack.c.l.b16 %v487
        %v503 = vunpack.c.l.b16 %v488
        %v504 = vunpack.c.l.b16 %v489
        %v505 = vpack.c.b16 %v502, %v501
        %v506 = vpack.c.b16 %v504, %v503
        %v510 = vsel %vm442, %v418, 0
        %512 = vmatprep.subr.bf16.mxu0 0
        %513 = vmatpush1.bf16.msra.mxu0 0
        %514 = vmatprep.subr.bf16.mxu0 0
        %515 = vmatpush1.bf16.msra.mxu0 0
        %516 = vmatprep.subr.bf16.mxu0 0
        %517 = vmatpush1.bf16.msra.mxu0 0
        %518 = vmatprep.subr.bf16.mxu0 0
        %519 = vmatpush1.bf16.msra.mxu0 0
        %520 = vmatprep.subr.bf16.mxu0 0
        %521 = vmatpush1.bf16.msra.mxu0 0
        %522 = vmatprep.subr.bf16.mxu0 0
        %523 = vmatpush1.bf16.msra.mxu0 0
        %524 = vmatprep.subr.bf16.mxu0 0
        %525 = vmatpush1.bf16.msra.mxu0 %v506
        %526 = vmatprep.subr.bf16.mxu0 0
        %527 = vmatpush1.bf16.msra.mxu0 %v505
        %528 = vmatprep.subr.bf16.mxu0 0
        %529 = vmatpush2.bf16.msra.mxu0 0
        %530 = vmatprep.subr.bf16.mxu0 0
        %531 = vmatpush2.bf16.msra.mxu0 0
        %532 = vmatprep.subr.bf16.mxu0 0
        %533 = vmatpush2.bf16.msra.mxu0 0
        %534 = vmatprep.subr.bf16.mxu0 0
        %535 = vmatpush2.bf16.msra.mxu0 0
        %536 = vmatprep.subr.bf16.mxu0 0
        %537 = vmatpush2.bf16.msra.mxu0 0
        %538 = vmatprep.subr.bf16.mxu0 0
        %539 = vmatpush2.bf16.msra.mxu0 0
        %540 = vmatprep.subr.bf16.mxu0 0
        %541 = vmatpush2.bf16.msra.mxu0 0
        %542 = vmatprep.subr.bf16.mxu0 0
        %543 = vmatpush2.bf16.msra.mxu0 0
        %544 = vmatprep.mubr.bf16.mxu0 0
        %545 = vmatmul.mubr.bf16.gmra.mxu0 %v510
        %v546 = vpop.f32.mrf.mxu0
        %v547 = vadd.f32 %v495, %v546
        %v548 = vpop.f32.mrf.mxu0
        %v549 = vpop.f32.mrf.mxu0
        %v550 = vpop.f32.mrf.mxu0
        %551 = vdwg.mxu0
        %v552 = vpack.c.bf16 %v481, %v481
        %v553 = vpack.c.bf16 %v547, %v547
        %v555 = vsel %vm442, %v552, 0
        %v558 = vsel %vm442, %v553, 0
        %560 = vmatprep.subr.bf16.mxu0 0
        %561 = vmatpush1.bf16.xpose.msra.mxu0 0
        %562 = vmatprep.subr.bf16.mxu0 0
        %563 = vmatpush1.bf16.xpose.msra.mxu0 0
        %564 = vmatprep.subr.bf16.mxu0 0
        %565 = vmatpush1.bf16.xpose.msra.mxu0 0
        %566 = vmatprep.subr.bf16.mxu0 0
        %567 = vmatpush1.bf16.xpose.msra.mxu0 0
        %568 = vmatprep.subr.bf16.mxu0 0
        %569 = vmatpush1.bf16.xpose.msra.mxu0 0
        %570 = vmatprep.subr.bf16.mxu0 0
        %571 = vmatpush1.bf16.xpose.msra.mxu0 0
        %572 = vmatprep.subr.bf16.mxu0 0
        %573 = vmatpush1.bf16.xpose.msra.mxu0 0
        %574 = vmatprep.subr.bf16.mxu0 0
        %575 = vmatpush1.bf16.xpose.msra.mxu0 %v558
        %576 = vmatprep.subr.bf16.mxu0 0
        %577 = vmatpush2.bf16.xpose.msra.mxu0 0
        %578 = vmatprep.subr.bf16.mxu0 0
        %579 = vmatpush2.bf16.xpose.msra.mxu0 0
        %580 = vmatprep.subr.bf16.mxu0 0
        %581 = vmatpush2.bf16.xpose.msra.mxu0 0
        %582 = vmatprep.subr.bf16.mxu0 0
        %583 = vmatpush2.bf16.xpose.msra.mxu0 0
        %584 = vmatprep.subr.bf16.mxu0 0
        %585 = vmatpush2.bf16.xpose.msra.mxu0 0
        %586 = vmatprep.subr.bf16.mxu0 0
        %587 = vmatpush2.bf16.xpose.msra.mxu0 0
        %588 = vmatprep.subr.bf16.mxu0 0
        %589 = vmatpush2.bf16.xpose.msra.mxu0 0
        %590 = vmatprep.subr.bf16.mxu0 0
        %591 = vmatpush2.bf16.xpose.msra.mxu0 0
        %592 = vmatprep.mubr.bf16.mxu0 0
        %593 = vmatmul.mubr.bf16.gmra.mxu0 %v555
        %v594 = vpop.f32.mrf.mxu0
        %v595 = vadd.f32 0.0, %v594
        %v596 = vpop.f32.mrf.mxu0
        %v597 = vpop.f32.mrf.mxu0
        %v598 = vpop.f32.mrf.mxu0
        %599 = vdwg.mxu0
        %v600 = vtanh.pop %v595
        %v601 = vmul.f32 %v600, 1.767767
        %v602 = vld [vmem:[%s373] sm:$0xff]
        %vm603 = vcmp.ne.s32.totalorder %v602, 0
        %v604 = vsel %vm603, %v601, -1e+09
        %vm605 = vcmask 64512
        %606 = vst.msk [vmem:[%s413] sm:$0xff] %vm605, %v604
        %s607 = sand.u32 %s216, 1
        %s608 = scalar_lea.sflag [#allocation4], %s607
        %s609 = sand.u32 %s216, 1
        %s610 = smul.addr %s609, 8
        %s611 = scalar_lea.vmem [#allocation11], %s610
        // Predicated region
        $region69: #{tpu_custom_call.1} parent=47 // pred_check
          %p612 = pneg %p226
        $region70: #{tpu_custom_call.1} parent=47 // pred_check_branch
          %614 = sbr.rel (%p612) target = $region72
        $region71: #{tpu_custom_call.1} parent=47 // pred_region
          %s616 = ssub.s32 128, 128
          %617 = vsyncadd %s608, %s616
          %s618 = sadd.s32 %s33, %s32
          %s619 = smul.addr %s618, 128
          %s620 = scalar_lea.hbm %s7, %s619
          %s622 = sshll.u32 %s611, 4
          %s623 = int_to_ptr.vmem [resolvable:$true] %s622
          %625 = dma.vmem_to_hbm [thread:$0]  %s623, 128, %s620, %s608
        $region72: #{tpu_custom_call.1} parent=47 // pred_fallthru
          _
      $region48: #{tpu_custom_call.1} parent=5 // pred_fallthru
        _
      %p626 = scmp.le.s32.totalorder 2, %s23
      // Predicated region
      $region73: #{tpu_custom_call.1} parent=5 // pred_check
        %p627 = pneg %p626
      $region74: #{tpu_custom_call.1} parent=5 // pred_check_branch
        %629 = sbr.rel (%p627) target = $region76
      $region75: #{tpu_custom_call.1} parent=5 // pred_region
        %s630 = ssub.s32 %s23, 2
        // Predicated region
        $region77: #{tpu_custom_call.1} parent=75 // pred_check
          %p631 = pneg %p232
        $region78: #{tpu_custom_call.1} parent=75 // pred_check_branch
          %633 = sbr.rel (%p631) target = $region80
        $region79: #{tpu_custom_call.1} parent=75 // pred_region
          %s634 = sand.u32 %s217, 1
          %s635 = scalar_lea.sflag [#allocation4], %s634
          %s636 = sand.u32 %s217, 1
          %s637 = smul.addr %s636, 8
          %s638 = scalar_lea.vmem [#allocation11], %s637
          %639 = dma.done %s635, 128
        $region80: #{tpu_custom_call.1} parent=75 // pred_fallthru
          _
      $region76: #{tpu_custom_call.1} parent=5 // pred_fallthru
        _
    $region6: #{tpu_custom_call.1} parent=1 // loop_footer
      %s27 = sadd.s32 1, %s23
    $region7: #{tpu_custom_call.1} parent=1 // loop_footer_branch
      %22 = sbr.rel target = $region3
    $region8: #{tpu_custom_call.1} parent=1 // loop_exit
      _
    %640 = vsyncpa [#allocation3], 1
    %s641 = scalar_lea.sflag [#allocation3], 1
    %642 = vsyncpa %s641, 1
    %643 = vsyncpa [#allocation6], 1
    %s644 = scalar_lea.sflag [#allocation6], 1
    %645 = vsyncpa %s644, 1
    %646 = vsyncpa [#allocation9], 1
    %647 = vsyncpa [#allocation4], 1
    %s648 = scalar_lea.sflag [#allocation4], 1
    %649 = vsyncpa %s648, 1

// kernel: tpu_custom_call.1
$region0: #{tpu_custom_call.1}
  #allocation0 [shape = 'u32[]', space=smem, size = 0x4, offset = 0x4, fixed_abs, tag = 'smem constant byte address 0x4 - core index']
  #allocation1 [shape = 'u32[144,128]{1,0:T(1,128)}', space=vmem, size = 0x12000, scoped, tag = 'internal scratch']
  %s0 = inlined_call_operand.hbm [shape: f32[2,8,32], index: 0, kind: input, shape index: {}]
  %s1 = inlined_call_operand.hbm [shape: f32[2,8,32], index: 1, kind: input, shape index: {}]
  %s2 = inlined_call_operand.hbm [shape: bf16[32,32], index: 2, kind: input, shape index: {}]
  %s3 = inlined_call_operand.vmem [shape: f32[1,32], index: 3, kind: input, shape index: {}]
  %s4 = inlined_call_operand.hbm [shape: bf16[32,32], index: 4, kind: input, shape index: {}]
  %s5 = inlined_call_operand.vmem [shape: f32[1,32], index: 5, kind: input, shape index: {}]
  %s6 = inlined_call_operand.hbm [shape: s32[2,8,8], index: 6, kind: input, shape index: {}]
  %s7 = inlined_call_operand.hbm [shape: f32[2,8,8], index: 7, kind: output, shape index: {}]
  %s8 = sld [smem:[#allocation0]]
  $region81: #{tpu_custom_call.1} parent=0
    _
  %s10 = ssub.s32 1, %s8
  %s11 = scalar_select 0, %s10, %s8
  $region1: #{tpu_custom_call.1} parent=0
    #allocation2 [shape = 'u8[8192]{0}', space=vmem, size = 0x2000, scoped, tag = 'input window, operand 0']
    #allocation3 [shape = 's32[2]{0}', space=sflag, size = 0x8, scoped, tag = 'scoped memory for tpu_custom_call.1']
    #allocation4 [shape = 's32[2]{0}', space=sflag, size = 0x8, scoped, tag = 'scoped memory for tpu_custom_call.1']
    #allocation5 [shape = 'u8[8192]{0}', space=vmem, size = 0x2000, scoped, tag = 'input window, operand 1']
    #allocation6 [shape = 's32[2]{0}', space=sflag, size = 0x8, scoped, tag = 'scoped memory for tpu_custom_call.1']
    #allocation7 [shape = 'u8[8192]{0}', space=vmem, size = 0x2000, scoped, tag = 'input window, operand 2, single buffered']
    #allocation8 [shape = 'u8[8192]{0}', space=vmem, size = 0x2000, scoped, tag = 'input window, operand 4, single buffered']
    #allocation9 [shape = 's32[1]{0}', space=sflag, size = 0x4, scoped, tag = 'scoped memory for tpu_custom_call.1']
    #allocation10 [shape = 'u8[8192]{0}', space=vmem, size = 0x2000, scoped, tag = 'input window, operand 6']
    #allocation11 [shape = 'u8[8192]{0}', space=vmem, size = 0x2000, scoped, tag = 'output window, operand 0']
    %12 = vsyncpa [#allocation3], 0
    %s13 = scalar_lea.sflag [#allocation3], 1
    %14 = vsyncpa %s13, 0
    %15 = vsyncpa [#allocation6], 0
    %s16 = scalar_lea.sflag [#allocation6], 1
    %17 = vsyncpa %s16, 0
    %18 = vsyncpa [#allocation9], 0
    %19 = vsyncpa [#allocation4], 0
    %s20 = scalar_lea.sflag [#allocation4], 1
    %21 = vsyncpa %s20, 0
    loop: start=0, step=1, limit=4
    $region2: #{tpu_custom_call.1} parent=1 // loop_pre_header
      _
    $region3: #{tpu_custom_call.1} parent=1 // loop_header
      %s23 = sphi 0, %s27
      %p24 = scmp.ge.s32.totalorder %s23, 4
      %s30 = sphi 0, %s42
      %s31 = sphi 0, %s38
      %s32 = sphi 0, %s30
      %s33 = sphi 0, %s31
      %s34 = sphi 0, %s32
      %s35 = sphi 0, %s33
      %s47 = sphi 0, %s49
      %s50 = sphi 0, %s47
      %s51 = sphi 0, %s50
      %s67 = sphi 0, %s51
      %s73 = sphi 0, %s75
      %s76 = sphi 0, %s73
      %s77 = sphi 0, %s76
      %s93 = sphi 0, %s77
      %s97 = sphi 0, %s97
      %s99 = sphi 0, %s97
      %s100 = sphi 0, %s99
      %s114 = sphi 0, %s100
      %s118 = sphi 0, %s118
      %s120 = sphi 0, %s118
      %s121 = sphi 0, %s120
      %s135 = sphi 0, %s121
      %s139 = sphi 0, %s139
      %s141 = sphi 0, %s139
      %s142 = sphi 0, %s141
      %s156 = sphi 0, %s142
      %s160 = sphi 0, %s160
      %s162 = sphi 0, %s160
      %s163 = sphi 0, %s162
      %s177 = sphi 0, %s163
      %s185 = sphi 0, %s187
      %s188 = sphi 0, %s185
      %s189 = sphi 0, %s188
      %s205 = sphi 0, %s189
      %s213 = sphi 0, %s215
      %s216 = sphi 0, %s213
      %s217 = sphi 0, %s216
      %s233 = sphi 0, %s217
    $region4: #{tpu_custom_call.1} parent=1 // loop_header_branch
      %26 = sbr.rel (%p24) target = $region8
    $region5: #{tpu_custom_call.1} parent=1 // loop_body
      %s28 = ssub.s32 %s23, 1
      %s29 = ssub.s32 %s23, 2
      %s36 = sadd.s32 1, %s31
      %p37 = scmp.ge.s32.totalorder %s36, 1
      %s38 = scalar_select %p37, 0, %s36
      %s39 = sadd.s32 1, %s30
      %s40 = scalar_select %p37, %s39, %s30
      %p41 = scmp.ge.s32.totalorder %s40, 2
      %s42 = scalar_select %p41, 0, %s40
      %s43 = ssub.s32 %s30, %s42
      %s44 = ssub.s32 %s31, %s38
      %s45 = sor.u32 %s43, %s44
      %p46 = scmp.eq.s32.totalorder %s45, 0
      %s48 = sadd.s32 %s47, 1
      %s49 = scalar_select %p46, %s47, %s48
      %p52 = pneg %p46
      %p53 = scmp.eq.s32.totalorder %s23, 1
      %p54 = por %p52, %p53
      %p55 = scmp.ne.s32.totalorder %s47, %s50
      %p56 = scmp.eq.s32.totalorder %s23, 0
      %p57 = por %p55, %p56
      %p58 = scmp.ne.s32.totalorder %s47, %s50
      %p59 = scmp.eq.s32.totalorder %s28, 1
      %p60 = por %p58, %p59
      %p61 = scmp.ne.s32.totalorder %s50, %s51
      %p62 = scmp.eq.s32.totalorder %s28, 0
      %p63 = por %p61, %p62
      %p64 = scmp.ne.s32.totalorder %s50, %s51
      %p65 = scmp.eq.s32.totalorder %s29, 1
      %p66 = por %p64, %p65
      %p68 = scmp.ne.s32.totalorder %s51, %s67
      %p69 = scmp.eq.s32.totalorder %s29, 0
      %p70 = por %p68, %p69
      %s71 = ssub.s32 %s30, %s42
      %p72 = scmp.eq.s32.totalorder %s71, 0
      %s74 = sadd.s32 %s73, 1
      %s75 = scalar_select %p72, %s73, %s74
      %p78 = pneg %p72
      %p79 = scmp.eq.s32.totalorder %s23, 1
      %p80 = por %p78, %p79
      %p81 = scmp.ne.s32.totalorder %s73, %s76
      %p82 = scmp.eq.s32.totalorder %s23, 0
      %p83 = por %p81, %p82
      %p84 = scmp.ne.s32.totalorder %s73, %s76
      %p85 = scmp.eq.s32.totalorder %s28, 1
      %p86 = por %p84, %p85
      %p87 = scmp.ne.s32.totalorder %s76, %s77
      %p88 = scmp.eq.s32.totalorder %s28, 0
      %p89 = por %p87, %p88
      %p90 = scmp.ne.s32.totalorder %s76, %s77
      %p91 = scmp.eq.s32.totalorder %s29, 1
      %p92 = por %p90, %p91
      %p94 = scmp.ne.s32.totalorder %s77, %s93
      %p95 = scmp.eq.s32.totalorder %s29, 0
      %p96 = por %p94, %p95
      %s98 = sadd.s32 %s97, 1
      %p101 = scmp.eq.s32.totalorder %s23, 1
      %p102 = scmp.ne.s32.totalorder %s97, %s99
      %p103 = scmp.eq.s32.totalorder %s23, 0
      %p104 = por %p102, %p103
      %p105 = scmp.ne.s32.totalorder %s97, %s99
      %p106 = scmp.eq.s32.totalorder %s28, 1
      %p107 = por %p105, %p106
      %p108 = scmp.ne.s32.totalorder %s99, %s100
      %p109 = scmp.eq.s32.totalorder %s28, 0
      %p110 = por %p108, %p109
      %p111 = scmp.ne.s32.totalorder %s99, %s100
      %p112 = scmp.eq.s32.totalorder %s29, 1
      %p113 = por %p111, %p112
      %p115 = scmp.ne.s32.totalorder %s100, %s114
      %p116 = scmp.eq.s32.totalorder %s29, 0
      %p117 = por %p115, %p116
      %s119 = sadd.s32 %s118, 1
      %p122 = scmp.eq.s32.totalorder %s23, 1
      %p123 = scmp.ne.s32.totalorder %s118, %s120
      %p124 = scmp.eq.s32.totalorder %s23, 0
      %p125 = por %p123, %p124
      %p126 = scmp.ne.s32.totalorder %s118, %s120
      %p127 = scmp.eq.s32.totalorder %s28, 1
      %p128 = por %p126, %p127
      %p129 = scmp.ne.s32.totalorder %s120, %s121
      %p130 = scmp.eq.s32.totalorder %s28, 0
      %p131 = por %p129, %p130
      %p132 = scmp.ne.s32.totalorder %s120, %s121
      %p133 = scmp.eq.s32.totalorder %s29, 1
      %p134 = por %p132, %p133
      %p136 = scmp.ne.s32.totalorder %s121, %s135
      %p137 = scmp.eq.s32.totalorder %s29, 0
      %p138 = por %p136, %p137
      %s140 = sadd.s32 %s139, 1
      %p143 = scmp.eq.s32.totalorder %s23, 1
      %p144 = scmp.ne.s32.totalorder %s139, %s141
      %p145 = scmp.eq.s32.totalorder %s23, 0
      %p146 = por %p144, %p145
      %p147 = scmp.ne.s32.totalorder %s139, %s141
      %p148 = scmp.eq.s32.totalorder %s28, 1
      %p149 = por %p147, %p148
      %p150 = scmp.ne.s32.totalorder %s141, %s142
      %p151 = scmp.eq.s32.totalorder %s28, 0
      %p152 = por %p150, %p151
      %p153 = scmp.ne.s32.totalorder %s141, %s142
      %p154 = scmp.eq.s32.totalorder %s29, 1
      %p155 = por %p153, %p154
      %p157 = scmp.ne.s32.totalorder %s142, %s156
      %p158 = scmp.eq.s32.totalorder %s29, 0
      %p159 = por %p157, %p158
      %s161 = sadd.s32 %s160, 1
      %p164 = scmp.eq.s32.totalorder %s23, 1
      %p165 = scmp.ne.s32.totalorder %s160, %s162
      %p166 = scmp.eq.s32.totalorder %s23, 0
      %p167 = por %p165, %p166
      %p168 = scmp.ne.s32.totalorder %s160, %s162
      %p169 = scmp.eq.s32.totalorder %s28, 1
      %p170 = por %p168, %p169
      %p171 = scmp.ne.s32.totalorder %s162, %s163
      %p172 = scmp.eq.s32.totalorder %s28, 0
      %p173 = por %p171, %p172
      %p174 = scmp.ne.s32.totalorder %s162, %s163
      %p175 = scmp.eq.s32.totalorder %s29, 1
      %p176 = por %p174, %p175
      %p178 = scmp.ne.s32.totalorder %s163, %s177
      %p179 = scmp.eq.s32.totalorder %s29, 0
      %p180 = por %p178, %p179
      %s181 = ssub.s32 %s30, %s42
      %s182 = ssub.s32 %s31, %s38
      %s183 = sor.u32 %s181, %s182
      %p184 = scmp.eq.s32.totalorder %s183, 0
      %s186 = sadd.s32 %s185, 1
      %s187 = scalar_select %p184, %s185, %s186
      %p190 = pneg %p184
      %p191 = scmp.eq.s32.totalorder %s23, 1
      %p192 = por %p190, %p191
      %p193 = scmp.ne.s32.totalorder %s185, %s188
      %p194 = scmp.eq.s32.totalorder %s23, 0
      %p195 = por %p193, %p194
      %p196 = scmp.ne.s32.totalorder %s185, %s188
      %p197 = scmp.eq.s32.totalorder %s28, 1
      %p198 = por %p196, %p197
      %p199 = scmp.ne.s32.totalorder %s188, %s189
      %p200 = scmp.eq.s32.totalorder %s28, 0
      %p201 = por %p199, %p200
      %p202 = scmp.ne.s32.totalorder %s188, %s189
      %p203 = scmp.eq.s32.totalorder %s29, 1
      %p204 = por %p202, %p203
      %p206 = scmp.ne.s32.totalorder %s189, %s205
      %p207 = scmp.eq.s32.totalorder %s29, 0
      %p208 = por %p206, %p207
      %s209 = ssub.s32 %s30, %s42
      %s210 = ssub.s32 %s31, %s38
      %s211 = sor.u32 %s209, %s210
      %p212 = scmp.eq.s32.totalorder %s211, 0
      %s214 = sadd.s32 %s213, 1
      %s215 = scalar_select %p212, %s213, %s214
      %p218 = pneg %p212
      %p219 = scmp.eq.s32.totalorder %s23, 1
      %p220 = por %p218, %p219
      %p221 = scmp.ne.s32.totalorder %s213, %s216
      %p222 = scmp.eq.s32.totalorder %s23, 0
      %p223 = por %p221, %p222
      %p224 = scmp.ne.s32.totalorder %s213, %s216
      %p225 = scmp.eq.s32.totalorder %s28, 1
      %p226 = por %p224, %p225
      %p227 = scmp.ne.s32.totalorder %s216, %s217
      %p228 = scmp.eq.s32.totalorder %s28, 0
      %p229 = por %p227, %p228
      %p230 = scmp.ne.s32.totalorder %s216, %s217
      %p231 = scmp.eq.s32.totalorder %s29, 1
      %p232 = por %p230, %p231
      %p234 = scmp.ne.s32.totalorder %s217, %s233
      %p235 = scmp.eq.s32.totalorder %s29, 0
      %p236 = por %p234, %p235
      %p237 = scmp.le.s32.totalorder 1, %s23
      %p238 = scmp.lt.s32.totalorder %s23, 3
      %p239 = pnand %p237, %p238
      %p240 = pneg %p239
      // Predicated region
      $region9: #{tpu_custom_call.1} parent=5 // pred_check
        _
      $region10: #{tpu_custom_call.1} parent=5 // pred_check_branch
        %242 = sbr.rel (%p239) target = $region12
      $region11: #{tpu_custom_call.1} parent=5 // pred_region
        %s243 = ssub.s32 %s23, 1
        // Predicated region
        $region13: #{tpu_custom_call.1} parent=11 // pred_check
          %p244 = pneg %p110
        $region14: #{tpu_custom_call.1} parent=11 // pred_check_branch
          %246 = sbr.rel (%p244) target = $region16
        $region15: #{tpu_custom_call.1} parent=11 // pred_region
          %s248 = ssub.s32 256, 256
          %249 = vsyncadd [#allocation6], %s248
          %s250 = sshll.u32 [#allocation7], 4
          %s251 = int_to_ptr.vmem [resolvable:$true] %s250
          %256 = dma.hbm_to_vmem [thread:$0]  %s2, 256, %s251, [#allocation6], 64, 64, 4
        $region16: #{tpu_custom_call.1} parent=11 // pred_fallthru
          _
        // Predicated region
        $region17: #{tpu_custom_call.1} parent=11 // pred_check
          %p257 = pneg %p131
        $region18: #{tpu_custom_call.1} parent=11 // pred_check_branch
          %259 = sbr.rel (%p257) target = $region20
        $region19: #{tpu_custom_call.1} parent=11 // pred_region
          _
        $region20: #{tpu_custom_call.1} parent=11 // pred_fallthru
          _
        // Predicated region
        $region21: #{tpu_custom_call.1} parent=11 // pred_check
          %p260 = pneg %p152
        $region22: #{tpu_custom_call.1} parent=11 // pred_check_branch
          %262 = sbr.rel (%p260) target = $region24
        $region23: #{tpu_custom_call.1} parent=11 // pred_region
          %s264 = ssub.s32 256, 256
          %265 = vsyncadd [#allocation9], %s264
          %s266 = sshll.u32 [#allocation8], 4
          %s267 = int_to_ptr.vmem [resolvable:$true] %s266
          %272 = dma.hbm_to_vmem [thread:$0]  %s4, 256, %s267, [#allocation9], 64, 64, 4
        $region24: #{tpu_custom_call.1} parent=11 // pred_fallthru
          _
        // Predicated region
        $region25: #{tpu_custom_call.1} parent=11 // pred_check
          %p273 = pneg %p173
        $region26: #{tpu_custom_call.1} parent=11 // pred_check_branch
          %275 = sbr.rel (%p273) target = $region28
        $region27: #{tpu_custom_call.1} parent=11 // pred_region
          _
        $region28: #{tpu_custom_call.1} parent=11 // pred_fallthru
          _
      $region12: #{tpu_custom_call.1} parent=5 // pred_fallthru
        _
      %p276 = scmp.lt.s32.totalorder %s23, 2
      // Predicated region
      $region29: #{tpu_custom_call.1} parent=5 // pred_check
        %p277 = pneg %p276
      $region30: #{tpu_custom_call.1} parent=5 // pred_check_branch
        %279 = sbr.rel (%p277) target = $region32
      $region31: #{tpu_custom_call.1} parent=5 // pred_region
        // Predicated region
        $region33: #{tpu_custom_call.1} parent=31 // pred_check
          %p280 = pneg %p57
        $region34: #{tpu_custom_call.1} parent=31 // pred_check_branch
          %282 = sbr.rel (%p280) target = $region36
        $region35: #{tpu_custom_call.1} parent=31 // pred_region
          %s283 = sand.u32 %s23, 1
          %s284 = scalar_lea.sflag [#allocation3], %s283
          %s285 = sand.u32 %s47, 1
          %s286 = smul.addr %s285, 8
          %s287 = scalar_lea.vmem [#allocation2], %s286
          %s289 = ssub.s32 128, 128
          %290 = vsyncadd %s284, %s289
          %s291 = sadd.s32 %s31, %s30
          %s292 = smul.addr %s291, 128
          %s293 = scalar_lea.hbm %s0, %s292
          %s295 = sshll.u32 %s287, 4
          %s296 = int_to_ptr.vmem [resolvable:$true] %s295
          %298 = dma.hbm_to_vmem [thread:$0]  %s293, 128, %s296, %s284
        $region36: #{tpu_custom_call.1} parent=31 // pred_fallthru
          _
        // Predicated region
        $region37: #{tpu_custom_call.1} parent=31 // pred_check
          %p299 = pneg %p83
        $region38: #{tpu_custom_call.1} parent=31 // pred_check_branch
          %301 = sbr.rel (%p299) target = $region40
        $region39: #{tpu_custom_call.1} parent=31 // pred_region
          %s302 = sand.u32 %s23, 1
          %s303 = scalar_lea.sflag [#allocation6], %s302
          %s304 = sand.u32 %s73, 1
          %s305 = smul.addr %s304, 8
          %s306 = scalar_lea.vmem [#allocation5], %s305
          %s308 = ssub.s32 128, 128
          %309 = vsyncadd %s303, %s308
          %s310 = smul.addr %s30, 128
          %s311 = scalar_lea.hbm %s1, %s310
          %s313 = sshll.u32 %s306, 4
          %s314 = int_to_ptr.vmem [resolvable:$true] %s313
          %316 = dma.hbm_to_vmem [thread:$0]  %s311, 128, %s314, %s303
        $region40: #{tpu_custom_call.1} parent=31 // pred_fallthru
          _
        // Predicated region
        $region41: #{tpu_custom_call.1} parent=31 // pred_check
          %p317 = pneg %p195
        $region42: #{tpu_custom_call.1} parent=31 // pred_check_branch
          %319 = sbr.rel (%p317) target = $region44
        $region43: #{tpu_custom_call.1} parent=31 // pred_region
          %s320 = sand.u32 %s23, 1
          %s321 = scalar_lea.sflag [#allocation3], %s320
          %s322 = sand.u32 %s185, 1
          %s323 = smul.addr %s322, 8
          %s324 = scalar_lea.vmem [#allocation10], %s323
          %s326 = ssub.s32 128, 128
          %327 = vsyncadd %s321, %s326
          %s328 = sadd.s32 %s31, %s30
          %s329 = smul.addr %s328, 128
          %s330 = scalar_lea.hbm %s6, %s329
          %s332 = sshll.u32 %s324, 4
          %s333 = int_to_ptr.vmem [resolvable:$true] %s332
          %335 = dma.hbm_to_vmem [thread:$0]  %s330, 128, %s333, %s321
        $region44: #{tpu_custom_call.1} parent=31 // pred_fallthru
          _
      $region32: #{tpu_custom_call.1} parent=5 // pred_fallthru
        _
      %p336 = scmp.le.s32.totalorder 1, %s23
      %p337 = scmp.lt.s32.totalorder %s23, 3
      %p338 = pnand %p336, %p337
      %p339 = pneg %p338
      // Predicated region
      $region45: #{tpu_custom_call.1} parent=5 // pred_check
        _
      $region46: #{tpu_custom_call.1} parent=5 // pred_check_branch
        %341 = sbr.rel (%p338) target = $region48
      $region47: #{tpu_custom_call.1} parent=5 // pred_region
        %s342 = ssub.s32 %s23, 1
        %s343 = sand.u32 %s28, 1
        %s344 = scalar_lea.sflag [#allocation3], %s343
        %s345 = sand.u32 %s50, 1
        %s346 = smul.addr %s345, 8
        %s347 = scalar_lea.vmem [#allocation2], %s346
        // Predicated region
        $region49: #{tpu_custom_call.1} parent=47 // pred_check
          %p348 = pneg %p63
        $region50: #{tpu_custom_call.1} parent=47 // pred_check_branch
          %350 = sbr.rel (%p348) target = $region52
        $region51: #{tpu_custom_call.1} parent=47 // pred_region
          %351 = dma.done %s344, 128
        $region52: #{tpu_custom_call.1} parent=47 // pred_fallthru
          _
        %s352 = sand.u32 %s28, 1
        %s353 = scalar_lea.sflag [#allocation6], %s352
        %s354 = sand.u32 %s76, 1
        %s355 = smul.addr %s354, 8
        %s356 = scalar_lea.vmem [#allocation5], %s355
        // Predicated region
        $region53: #{tpu_custom_call.1} parent=47 // pred_check
          %p357 = pneg %p89
        $region54: #{tpu_custom_call.1} parent=47 // pred_check_branch
          %359 = sbr.rel (%p357) target = $region56
        $region55: #{tpu_custom_call.1} parent=47 // pred_region
          %360 = dma.done %s353, 128
        $region56: #{tpu_custom_call.1} parent=47 // pred_fallthru
          _
        // Predicated region
        $region57: #{tpu_custom_call.1} parent=47 // pred_check
          %p361 = pneg %p110
        $region58: #{tpu_custom_call.1} parent=47 // pred_check_branch
          %363 = sbr.rel (%p361) target = $region60
        $region59: #{tpu_custom_call.1} parent=47 // pred_region
          %364 = dma.done [#allocation6], 256
        $region60: #{tpu_custom_call.1} parent=47 // pred_fallthru
          _
        // Predicated region
        $region61: #{tpu_custom_call.1} parent=47 // pred_check
          %p365 = pneg %p152
        $region62: #{tpu_custom_call.1} parent=47 // pred_check_branch
          %367 = sbr.rel (%p365) target = $region64
        $region63: #{tpu_custom_call.1} parent=47 // pred_region
          %368 = dma.done [#allocation9], 256
        $region64: #{tpu_custom_call.1} parent=47 // pred_fallthru
          _
        %s369 = sand.u32 %s28, 1
        %s370 = scalar_lea.sflag [#allocation3], %s369
        %s371 = sand.u32 %s188, 1
        %s372 = smul.addr %s371, 8
        %s373 = scalar_lea.vmem [#allocation10], %s372
        // Predicated region
        $region65: #{tpu_custom_call.1} parent=47 // pred_check
          %p374 = pneg %p201
        $region66: #{tpu_custom_call.1} parent=47 // pred_check_branch
          %376 = sbr.rel (%p374) target = $region68
        $region67: #{tpu_custom_call.1} parent=47 // pred_region
          %377 = dma.done %s370, 128
        $region68: #{tpu_custom_call.1} parent=47 // pred_fallthru
          _
        %s378 = sand.u32 %s28, 1
        %s379 = scalar_lea.sflag [#allocation3], %s378
        %s380 = sand.u32 %s50, 1
        %s381 = smul.addr %s380, 8
        %s382 = scalar_lea.vmem [#allocation2], %s381
        %p383 = pneg %p63
        %p384 = pneg %p60
        %s385 = sand.u32 %s28, 1
        %s386 = scalar_lea.sflag [#allocation6], %s385
        %s387 = sand.u32 %s76, 1
        %s388 = smul.addr %s387, 8
        %s389 = scalar_lea.vmem [#allocation5], %s388
        %p390 = pneg %p89
        %p391 = pneg %p86
        %p392 = pneg %p110
        %p393 = pneg %p107
        %p394 = pneg %p131
        %p395 = pneg %p128
        %p396 = pneg %p152
        %p397 = pneg %p149
        %p398 = pneg %p173
        %p399 = pneg %p170
        %s400 = sand.u32 %s28, 1
        %s401 = scalar_lea.sflag [#allocation3], %s400
        %s402 = sand.u32 %s188, 1
        %s403 = smul.addr %s402, 8
        %s404 = scalar_lea.vmem [#allocation10], %s403
        %p405 = pneg %p201
        %p406 = pneg %p198
        %p407 = pneg %p229
        %p408 = pneg %p226
        %s409 = sand.u32 %s216, 1
        %s410 = scalar_lea.sflag [#allocation4], %s409
        %s411 = sand.u32 %s216, 1
        %s412 = smul.addr %s411, 8
        %s413 = scalar_lea.vmem [#allocation11], %s412
        %v415 = vld [vmem:[%s347] sm:$0xff]
        %v416 = vpack.c.bf16 %v415, %v415
        %v417 = vld [vmem:[%s356] sm:$0xff]
        %v418 = vpack.c.bf16 %v417, %v417
        %v419 = vld [vmem:[#allocation7] sm:$0xf]
        %v420 = vld [vmem:[#allocation7 + $0x4] sm:$0xf]
        %v421 = vld [vmem:[#allocation7 + $0x8] sm:$0xf]
        %v422 = vld [vmem:[#allocation7 + $0xc] sm:$0xf]
        %v423 = vld [vmem:[%s3] sm:$0x1]
        %v425 = vlaneseq
        %v426 = vshrl.u32 %v425, 7
        %v427 = vsub.s32 0, %v426
        %v428 = vrot.slane %v423, %v427
        %v434 = vunpack.c.l.b16 %v419
        %v435 = vunpack.c.l.b16 %v420
        %v436 = vunpack.c.l.b16 %v421
        %v437 = vunpack.c.l.b16 %v422
        %v438 = vpack.c.b16 %v435, %v434
        %v439 = vpack.c.b16 %v437, %v436
        %vm442 = vcmask 261120
        %v444 = vsel %vm442, %v416, 0
        %446 = vmatprep.subr.bf16.mxu0 0
        %447 = vmatpush1.bf16.msra.mxu0 0
        %448 = vmatprep.subr.bf16.mxu0 0
        %449 = vmatpush1.bf16.msra.mxu0 0
        %450 = vmatprep.subr.bf16.mxu0 0
        %451 = vmatpush1.bf16.msra.mxu0 0
        %452 = vmatprep.subr.bf16.mxu0 0
        %453 = vmatpush1.bf16.msra.mxu0 0
        %454 = vmatprep.subr.bf16.mxu0 0
        %455 = vmatpush1.bf16.msra.mxu0 0
        %456 = vmatprep.subr.bf16.mxu0 0
        %457 = vmatpush1.bf16.msra.mxu0 0
        %458 = vmatprep.subr.bf16.mxu0 0
        %459 = vmatpush1.bf16.msra.mxu0 %v439
        %460 = vmatprep.subr.bf16.mxu0 0
        %461 = vmatpush1.bf16.msra.mxu0 %v438
        %462 = vmatprep.subr.bf16.mxu0 0
        %463 = vmatpush2.bf16.msra.mxu0 0
        %464 = vmatprep.subr.bf16.mxu0 0
        %465 = vmatpush2.bf16.msra.mxu0 0
        %466 = vmatprep.subr.bf16.mxu0 0
        %467 = vmatpush2.bf16.msra.mxu0 0
        %468 = vmatprep.subr.bf16.mxu0 0
        %469 = vmatpush2.bf16.msra.mxu0 0
        %470 = vmatprep.subr.bf16.mxu0 0
        %471 = vmatpush2.bf16.msra.mxu0 0
        %472 = vmatprep.subr.bf16.mxu0 0
        %473 = vmatpush2.bf16.msra.mxu0 0
        %474 = vmatprep.subr.bf16.mxu0 0
        %475 = vmatpush2.bf16.msra.mxu0 0
        %476 = vmatprep.subr.bf16.mxu0 0
        %477 = vmatpush2.bf16.msra.mxu0 0
        %478 = vmatprep.mubr.bf16.mxu0 0
        %479 = vmatmul.mubr.bf16.gmra.mxu0 %v444
        %v480 = vpop.f32.mrf.mxu0
        %v481 = vadd.f32 %v428, %v480
        %v482 = vpop.f32.mrf.mxu0
        %v483 = vpop.f32.mrf.mxu0
        %v484 = vpop.f32.mrf.mxu0
        %485 = vdwg.mxu0
        %v486 = vld [vmem:[#allocation8] sm:$0xf]
        %v487 = vld [vmem:[#allocation8 + $0x4] sm:$0xf]
        %v488 = vld [vmem:[#allocation8 + $0x8] sm:$0xf]
        %v489 = vld [vmem:[#allocation8 + $0xc] sm:$0xf]
        %v490 = vld [vmem:[%s5] sm:$0x1]
        %v492 = vlaneseq
        %v493 = vshrl.u32 %v492, 7
        %v494 = vsub.s32 0, %v493
        %v495 = vrot.slane %v490, %v494
        %v501 = vunpack.c.l.b16 %v486
        %v502 = vunpack.c.l.b16 %v487
        %v503 = vunpack.c.l.b16 %v488
        %v504 = vunpack.c.l.b16 %v489
        %v505 = vpack.c.b16 %v502, %v501
        %v506 = vpack.c.b16 %v504, %v503
        %v510 = vsel %vm442, %v418, 0
        %512 = vmatprep.subr.bf16.mxu0 0
        %513 = vmatpush1.bf16.msra.mxu0 0
        %514 = vmatprep.subr.bf16.mxu0 0
        %515 = vmatpush1.bf16.msra.mxu0 0
        %516 = vmatprep.subr.bf16.mxu0 0
        %517 = vmatpush1.bf16.msra.mxu0 0
        %518 = vmatprep.subr.bf16.mxu0 0
        %519 = vmatpush1.bf16.msra.mxu0 0
        %520 = vmatprep.subr.bf16.mxu0 0
        %521 = vmatpush1.bf16.msra.mxu0 0
        %522 = vmatprep.subr.bf16.mxu0 0
        %523 = vmatpush1.bf16.msra.mxu0 0
        %524 = vmatprep.subr.bf16.mxu0 0
        %525 = vmatpush1.bf16.msra.mxu0 %v506
        %526 = vmatprep.subr.bf16.mxu0 0
        %527 = vmatpush1.bf16.msra.mxu0 %v505
        %528 = vmatprep.subr.bf16.mxu0 0
        %529 = vmatpush2.bf16.msra.mxu0 0
        %530 = vmatprep.subr.bf16.mxu0 0
        %531 = vmatpush2.bf16.msra.mxu0 0
        %532 = vmatprep.subr.bf16.mxu0 0
        %533 = vmatpush2.bf16.msra.mxu0 0
        %534 = vmatprep.subr.bf16.mxu0 0
        %535 = vmatpush2.bf16.msra.mxu0 0
        %536 = vmatprep.subr.bf16.mxu0 0
        %537 = vmatpush2.bf16.msra.mxu0 0
        %538 = vmatprep.subr.bf16.mxu0 0
        %539 = vmatpush2.bf16.msra.mxu0 0
        %540 = vmatprep.subr.bf16.mxu0 0
        %541 = vmatpush2.bf16.msra.mxu0 0
        %542 = vmatprep.subr.bf16.mxu0 0
        %543 = vmatpush2.bf16.msra.mxu0 0
        %544 = vmatprep.mubr.bf16.mxu0 0
        %545 = vmatmul.mubr.bf16.gmra.mxu0 %v510
        %v546 = vpop.f32.mrf.mxu0
        %v547 = vadd.f32 %v495, %v546
        %v548 = vpop.f32.mrf.mxu0
        %v549 = vpop.f32.mrf.mxu0
        %v550 = vpop.f32.mrf.mxu0
        %551 = vdwg.mxu0
        %v552 = vpack.c.bf16 %v481, %v481
        %v553 = vpack.c.bf16 %v547, %v547
        %v555 = vsel %vm442, %v552, 0
        %v558 = vsel %vm442, %v553, 0
        %560 = vmatprep.subr.bf16.mxu0 0
        %561 = vmatpush1.bf16.xpose.msra.mxu0 0
        %562 = vmatprep.subr.bf16.mxu0 0
        %563 = vmatpush1.bf16.xpose.msra.mxu0 0
        %564 = vmatprep.subr.bf16.mxu0 0
        %565 = vmatpush1.bf16.xpose.msra.mxu0 0
        %566 = vmatprep.subr.bf16.mxu0 0
        %567 = vmatpush1.bf16.xpose.msra.mxu0 0
        %568 = vmatprep.subr.bf16.mxu0 0
        %569 = vmatpush1.bf16.xpose.msra.mxu0 0
        %570 = vmatprep.subr.bf16.mxu0 0
        %571 = vmatpush1.bf16.xpose.msra.mxu0 0
        %572 = vmatprep.subr.bf16.mxu0 0
        %573 = vmatpush1.bf16.xpose.msra.mxu0 0
        %574 = vmatprep.subr.bf16.mxu0 0
        %575 = vmatpush1.bf16.xpose.msra.mxu0 %v558
        %576 = vmatprep.subr.bf16.mxu0 0
        %577 = vmatpush2.bf16.xpose.msra.mxu0 0
        %578 = vmatprep.subr.bf16.mxu0 0
        %579 = vmatpush2.bf16.xpose.msra.mxu0 0
        %580 = vmatprep.subr.bf16.mxu0 0
        %581 = vmatpush2.bf16.xpose.msra.mxu0 0
        %582 = vmatprep.subr.bf16.mxu0 0
        %583 = vmatpush2.bf16.xpose.msra.mxu0 0
        %584 = vmatprep.subr.bf16.mxu0 0
        %585 = vmatpush2.bf16.xpose.msra.mxu0 0
        %586 = vmatprep.subr.bf16.mxu0 0
        %587 = vmatpush2.bf16.xpose.msra.mxu0 0
        %588 = vmatprep.subr.bf16.mxu0 0
        %589 = vmatpush2.bf16.xpose.msra.mxu0 0
        %590 = vmatprep.subr.bf16.mxu0 0
        %591 = vmatpush2.bf16.xpose.msra.mxu0 0
        %592 = vmatprep.mubr.bf16.mxu0 0
        %593 = vmatmul.mubr.bf16.gmra.mxu0 %v555
        %v594 = vpop.f32.mrf.mxu0
        %v595 = vadd.f32 0.0, %v594
        %v596 = vpop.f32.mrf.mxu0
        %v597 = vpop.f32.mrf.mxu0
        %v598 = vpop.f32.mrf.mxu0
        %599 = vdwg.mxu0
        %v600 = vtanh.pop %v595
        %v601 = vmul.f32 %v600, 1.767767
        %v602 = vld [vmem:[%s373] sm:$0xff]
        %vm603 = vcmp.ne.s32.totalorder %v602, 0
        %v604 = vsel %vm603, %v601, -1e+09
        %vm605 = vcmask 64512
        %606 = vst.msk [vmem:[%s413] sm:$0xff] %vm605, %v604
        %s607 = sand.u32 %s216, 1
        %s608 = scalar_lea.sflag [#allocation4], %s607
        %s609 = sand.u32 %s216, 1
        %s610 = smul.addr %s609, 8
        %s611 = scalar_lea.vmem [#allocation11], %s610
        // Predicated region
        $region69: #{tpu_custom_call.1} parent=47 // pred_check
          %p612 = pneg %p226
        $region70: #{tpu_custom_call.1} parent=47 // pred_check_branch
          %614 = sbr.rel (%p612) target = $region72
        $region71: #{tpu_custom_call.1} parent=47 // pred_region
          %s616 = ssub.s32 128, 128
          %617 = vsyncadd %s608, %s616
          %s618 = sadd.s32 %s33, %s32
          %s619 = smul.addr %s618, 128
          %s620 = scalar_lea.hbm %s7, %s619
          %s622 = sshll.u32 %s611, 4
          %s623 = int_to_ptr.vmem [resolvable:$true] %s622
          %625 = dma.vmem_to_hbm [thread:$0]  %s623, 128, %s620, %s608
        $region72: #{tpu_custom_call.1} parent=47 // pred_fallthru
          _
      $region48: #{tpu_custom_call.1} parent=5 // pred_fallthru
        _
      %p626 = scmp.le.s32.totalorder 2, %s23
      // Predicated region
      $region73: #{tpu_custom_call.1} parent=5 // pred_check
        %p627 = pneg %p626
      $region74: #{tpu_custom_call.1} parent=5 // pred_check_branch
        %629 = sbr.rel (%p627) target = $region76
      $region75: #{tpu_custom_call.1} parent=5 // pred_region
        %s630 = ssub.s32 %s23, 2
        // Predicated region
        $region77: #{tpu_custom_call.1} parent=75 // pred_check
          %p631 = pneg %p232
        $region78: #{tpu_custom_call.1} parent=75 // pred_check_branch
          %633 = sbr.rel (%p631) target = $region80
        $region79: #{tpu_custom_call.1} parent=75 // pred_region
          %s634 = sand.u32 %s217, 1
          %s635 = scalar_lea.sflag [#allocation4], %s634
          %s636 = sand.u32 %s217, 1
          %s637 = smul.addr %s636, 8
          %s638 = scalar_lea.vmem [#allocation11], %s637
          %639 = dma.done %s635, 128
        $region80: #{tpu_custom_call.1} parent=75 // pred_fallthru
          _
      $region76: #{tpu_custom_call.1} parent=5 // pred_fallthru
        _
    $region6: #{tpu_custom_call.1} parent=1 // loop_footer
      %s27 = sadd.s32 1, %s23
    $region7: #{tpu_custom_call.1} parent=1 // loop_footer_branch
      %22 = sbr.rel target = $region3
    $region8: #{tpu_custom_call.1} parent=1 // loop_exit
      _
    %640 = vsyncpa [#allocation3], 1
    %s641 = scalar_lea.sflag [#allocation3], 1
    %642 = vsyncpa %s641, 1
    %643 = vsyncpa [#allocation6], 1
    %s644 = scalar_lea.sflag [#allocation6], 1
    %645 = vsyncpa %s644, 1
    %646 = vsyncpa [#allocation9], 1
    %647 = vsyncpa [#allocation4], 1
    %s648 = scalar_lea.sflag [#allocation4], 1
    %649 = vsyncpa %s648, 1

</llo_original>
